<compile_context>
chip_gen: v5e
topology: v5e:2x2
jax: 0.10.0
libtpu: 0.0.40
codegen_flags: <defaults>
</compile_context>

<pallas_src>
import functools

import jax
import jax.numpy as jnp
from jax import lax
from jax.experimental import pallas as pl
from jax.experimental.pallas import tpu as pltpu

_ROW0 = 8  # sublane-aligned scratch row where real (unpadded) data starts


# ----------------------------------------------------------------------------
# Fused Inception kernel (one image per grid step)
# ----------------------------------------------------------------------------
def _inception_kernel(x_ref, ash_ref, bsh_ref, b3_ref, bb3_ref, b5_ref,
                      bb5_ref, a4_ref, bb4_ref, o_ref, t3s, t5s, xps, *,
                      H, W, Cin, c1, m3, c3, m5, c5, cp):
    """Whole Inception block for one image in (rows=H, lanes=W*C) layout.

    x_ref  : (H, W*Cin)                               input, (w,c) lanes
    ash_ref: (W*Cin, c1*W + (W+2)*m3 + (W+4)*m5)      merged 1x1 weights
    b3_ref : (3, (W+2)*m3, c3*W)                      banded 3x3 weights (per kh)
    b5_ref : (5, (W+4)*m5, c5*W)                      banded 5x5 weights (per kh)
    a4_ref : (W*Cin, cp*W)                            pool-branch 1x1 weights
    b*_ref : (1, ...)                                 bias rows
    o_ref  : (H, (c1+c3+c5+cp)*W)                     lane-dense output slab
    t3s/t5s/xps : VMEM scratch for the H/-inf padded intermediates.
    """
    f32 = jnp.float32
    x2d = x_ref[...].astype(f32)                          # (H, W*Cin)

    n1 = c1 * W                      # branch-1 output columns
    n2 = (W + 2) * m3                # branch-2 intermediate (W-padded) columns
    n3 = (W + 4) * m5                # branch-3 intermediate (W-padded) columns

    # ---- shared-input 1x1 ConvBN+ReLU (branch 1 + 3x3/5x5 reducers) ---------
    ysh = jnp.dot(x2d, ash_ref[...], preferred_element_type=f32)
    ysh = jnp.maximum(ysh + bsh_ref[...], 0.0)
    o_ref[:, 0:n1] = ysh[:, 0:n1].astype(o_ref.dtype)

    # Stage H-padded intermediates in VMEM (W padding already in the matmul:
    # the pad column groups of A_sh are zero and relu(0 + 0) == 0).
    t3s[...] = jnp.zeros(t3s.shape, f32)
    t3s[_ROW0:_ROW0 + H, :] = ysh[:, n1:n1 + n2]
    t5s[...] = jnp.zeros(t5s.shape, f32)
    t5s[_ROW0:_ROW0 + H, :] = ysh[:, n1 + n2:n1 + n2 + n3]

    # ---- branch 2: 3x3 ConvBN+ReLU (pad 1) -----------------------------------
    acc3 = jnp.dot(t3s[_ROW0 - 1:_ROW0 - 1 + H, :], b3_ref[0],
                   preferred_element_type=f32)
    for kh in range(1, 3):
        acc3 = acc3 + jnp.dot(t3s[_ROW0 - 1 + kh:_ROW0 - 1 + kh + H, :],
                              b3_ref[kh], preferred_element_type=f32)
    acc3 = jnp.maximum(acc3 + bb3_ref[...], 0.0)
    o_ref[:, n1:n1 + c3 * W] = acc3.astype(o_ref.dtype)

    # ---- branch 3: 5x5 ConvBN+ReLU (pad 2) -----------------------------------
    acc5 = jnp.dot(t5s[_ROW0 - 2:_ROW0 - 2 + H, :], b5_ref[0],
                   preferred_element_type=f32)
    for kh in range(1, 5):
        acc5 = acc5 + jnp.dot(t5s[_ROW0 - 2 + kh:_ROW0 - 2 + kh + H, :],
                              b5_ref[kh], preferred_element_type=f32)
    acc5 = jnp.maximum(acc5 + bb5_ref[...], 0.0)
    o_ref[:, (c1 + c3) * W:(c1 + c3 + c5) * W] = acc5.astype(o_ref.dtype)

    # ---- branch 4: 3x3 maxpool (s1, p1, -inf border) + 1x1 ConvBN+ReLU -------
    xps[...] = jnp.full(xps.shape, -jnp.inf, f32)
    xps[_ROW0:_ROW0 + H, Cin:Cin + W * Cin] = x2d
    cm = jnp.maximum(
        jnp.maximum(xps[_ROW0 - 1:_ROW0 - 1 + H, :],
                    xps[_ROW0:_ROW0 + H, :]),
        xps[_ROW0 + 1:_ROW0 + 1 + H, :])                  # (H, (W+2)*Cin)
    pooled = jnp.maximum(
        jnp.maximum(cm[:, 0:W * Cin], cm[:, Cin:Cin + W * Cin]),
        cm[:, 2 * Cin:2 * Cin + W * Cin])                 # (H, W*Cin)
    y4 = jnp.dot(pooled, a4_ref[...], preferred_element_type=f32)
    y4 = jnp.maximum(y4 + bb4_ref[...], 0.0)
    o_ref[:, (c1 + c3 + c5) * W:(c1 + c3 + c5 + cp) * W] = y4.astype(o_ref.dtype)


# ----------------------------------------------------------------------------
# Wrapper-side weight preparation (BN folding + banded, lane-dense matrices)
# ----------------------------------------------------------------------------
def _one_by_one_wmajor(wmat, W, pad):
    """1x1 weights (Cin,Cout) -> (W*Cin, (W+2p)*Cout), w-major output columns
    with `pad` zero column groups on each side (free W padding)."""
    cin, cout = wmat.shape
    wp = W + 2 * pad
    shift = (jnp.arange(wp)[None, :] ==
             jnp.arange(W)[:, None] + pad).astype(wmat.dtype)      # (W, wp)
    a = shift[:, None, :, None] * wmat[None, :, None, :]           # (W,cin,wp,cout)
    return a.reshape(W * cin, wp * cout)


def _one_by_one_cmajor(wmat, W):
    """1x1 weights (Cin,Cout) -> (W*Cin, Cout*W), channel-major output columns."""
    cin, cout = wmat.shape
    eye = jnp.eye(W, dtype=wmat.dtype)
    a = eye[:, None, None, :] * wmat[None, :, :, None]             # (W,cin,cout,W)
    return a.reshape(W * cin, cout * W)


def _conv_band_cmajor(wt, W, pad):
    """KxK weights (KH,KW,Cin,Cout) -> (KH, (W+2p)*Cin, Cout*W): one banded
    matrix per kh implementing the sum over (kw, cin)."""
    KH, KW, cin, cout = wt.shape
    wp = W + 2 * pad
    shift = (jnp.arange(wp)[None, None, :] ==
             jnp.arange(W)[None, :, None] +
             jnp.arange(KW)[:, None, None]).astype(wt.dtype)       # (KW, W, wp)
    b = (shift[None, :, :, :, None, None] *
         wt[:, :, None, None, :, :]).sum(axis=1)                   # (KH,W,wp,cin,cout)
    b = b.transpose(0, 2, 3, 4, 1)                                 # (KH,wp,cin,cout,W)
    return b.reshape(KH, wp * cin, cout * W)


def _bias_cmajor(b, W):
    return jnp.tile(b[:, None], (1, W)).reshape(1, -1)             # [o*W + w] = b[o]


def _bias_wmajor(b, W, pad):
    cout = b.shape[0]
    wp = W + 2 * pad
    mask = ((jnp.arange(wp) >= pad) &
            (jnp.arange(wp) < pad + W)).astype(b.dtype)
    return (mask[:, None] * b[None, :]).reshape(1, wp * cout)      # zero in pad cols


def build_inception_operands(params, W):
    """Fold BN scale into conv weights and build banded, lane-dense matrices."""
    w1, s1, bi1 = params["b1"]
    w2a, s2a, bi2a = params["b2a"]
    w2b, s2b, bi2b = params["b2b"]
    w3a, s3a, bi3a = params["b3a"]
    w3b, s3b, bi3b = params["b3b"]
    w4, s4, bi4 = params["b4"]

    a1 = _one_by_one_cmajor(w1[0, 0] * s1, W)
    a2a = _one_by_one_wmajor(w2a[0, 0] * s2a, W, pad=1)
    a3a = _one_by_one_wmajor(w3a[0, 0] * s3a, W, pad=2)
    return {
        "A_sh": jnp.concatenate([a1, a2a, a3a], axis=1),
        "b_sh": jnp.concatenate([_bias_cmajor(bi1, W),
                                 _bias_wmajor(bi2a, W, 1),
                                 _bias_wmajor(bi3a, W, 2)], axis=1),
        "B3": _conv_band_cmajor(w2b * s2b, W, pad=1),
        "bb3": _bias_cmajor(bi2b, W),
        "B5": _conv_band_cmajor(w3b * s3b, W, pad=2),
        "bb5": _bias_cmajor(bi3b, W),
        "A4": _one_by_one_cmajor(w4[0, 0] * s4, W),
        "bb4": _bias_cmajor(bi4, W),
    }


# ----------------------------------------------------------------------------
# Forward (NCHW in / NCHW out, matching the PyTorch module)
# ----------------------------------------------------------------------------
def make_inception_forward(H, W, in_dim, out_dim, mid3, out3, mid5, out5, pool):
    C_total = out_dim + out3 + out5 + pool
    kern = functools.partial(_inception_kernel, H=H, W=W, Cin=in_dim,
                             c1=out_dim, m3=mid3, c3=out3,
                             m5=mid5, c5=out5, cp=pool)

    @jax.jit
    def forward(x_nchw, ops):
        N = x_nchw.shape[0]
        # NCHW -> (N, H, W*Cin): channels last, then flatten (w, c) into lanes.
        x2d = jnp.transpose(x_nchw, (0, 2, 3, 1)).reshape(N, H, W * in_dim)

        def full(a):
            return pl.BlockSpec(a.shape, lambda n, nd=a.ndim: (0,) * nd)

        slab = pl.pallas_call(
            kern,
            out_shape=jax.ShapeDtypeStruct((N, H, C_total * W), jnp.float32),
            grid=(N,),
            in_specs=[
                pl.BlockSpec((None, H, W * in_dim), lambda n: (n, 0, 0)),
                full(ops["A_sh"]), full(ops["b_sh"]),
                full(ops["B3"]), full(ops["bb3"]),
                full(ops["B5"]), full(ops["bb5"]),
                full(ops["A4"]), full(ops["bb4"]),
            ],
            out_specs=pl.BlockSpec((None, H, C_total * W), lambda n: (n, 0, 0)),
            scratch_shapes=[
                pltpu.VMEM((_ROW0 + H + 1, (W + 2) * mid3), jnp.float32),
                pltpu.VMEM((_ROW0 + H + 2, (W + 4) * mid5), jnp.float32),
                pltpu.VMEM((_ROW0 + H + 1, (W + 2) * in_dim), jnp.float32),
            ],
            compiler_params=pltpu.CompilerParams(
                dimension_semantics=("parallel",)),
        )(x2d, ops["A_sh"], ops["b_sh"], ops["B3"], ops["bb3"],
          ops["B5"], ops["bb5"], ops["A4"], ops["bb4"])

        # (N, H, C_total*W) -> NCHW: pure layout plumbing outside the kernel.
        return slab.reshape(N, H, C_total, W).transpose(0, 2, 1, 3)

    return forward


# ----------------------------------------------------------------------------
# Synthetic parameters (deterministic)
# ----------------------------------------------------------------------------
def make_convbn_params(key, cin, cout, ksize):
    """Conv2d (no bias) weights + folded inference-form BatchNorm2d."""
    # TODO(synk): PyTorch BatchNorm2d in training mode uses batch statistics;
    # here BN is folded in inference form with synthetic running stats.
    kw_, kg, kb, km, kv = jax.random.split(key, 5)
    fan_in = cin * ksize * ksize
    w = jax.random.normal(kw_, (ksize, ksize, cin, cout), jnp.float32)
    w = w * (2.0 / fan_in) ** 0.5
    gamma = 1.0 + 0.1 * jax.random.normal(kg, (cout,), jnp.float32)
    beta = 0.1 * jax.random.normal(kb, (cout,), jnp.float32)
    mean = 0.1 * jax.random.normal(km, (cout,), jnp.float32)
    var = jax.random.uniform(kv, (cout,), jnp.float32, 0.5, 1.5)
    scale = gamma / jnp.sqrt(var + 1e-5)
    bias = beta - mean * scale
    return w, scale, bias


def make_inception_params(key, in_dim, out_dim, mid3, out3, mid5, out5, pool):
    ks = jax.random.split(key, 6)
    return {
        "b1": make_convbn_params(ks[0], in_dim, out_dim, 1),
        "b2a": make_convbn_params(ks[1], in_dim, mid3, 1),
        "b2b": make_convbn_params(ks[2], mid3, out3, 3),
        "b3a": make_convbn_params(ks[3], in_dim, mid5, 1),
        "b3b": make_convbn_params(ks[4], mid5, out5, 5),
        "b4": make_convbn_params(ks[5], in_dim, pool, 1),
    }


# ----------------------------------------------------------------------------
# Pure-JAX reference (for correctness check only)
# ----------------------------------------------------------------------------
def _convbn_relu_ref(x, w, scale, bias, padding):
    y = lax.conv_general_dilated(
        x, w, window_strides=(1, 1),
        padding=((padding, padding), (padding, padding)),
        dimension_numbers=("NHWC", "HWIO", "NHWC"),
        precision=lax.Precision.HIGHEST)
    return jnp.maximum(y * scale + bias, 0.0)


def inception_reference(x_nchw, params):
    x = jnp.transpose(x_nchw, (0, 2, 3, 1))
    w, s, b = params["b1"]
    o1 = _convbn_relu_ref(x, w, s, b, padding=0)
    w, s, b = params["b2a"]
    t = _convbn_relu_ref(x, w, s, b, padding=0)
    w, s, b = params["b2b"]
    o2 = _convbn_relu_ref(t, w, s, b, padding=1)
    w, s, b = params["b3a"]
    t = _convbn_relu_ref(x, w, s, b, padding=0)
    w, s, b = params["b3b"]
    o3 = _convbn_relu_ref(t, w, s, b, padding=2)
    p = lax.reduce_window(x, -jnp.inf, lax.max, (1, 3, 3, 1), (1, 1, 1, 1),
                          ((0, 0), (1, 1), (1, 1), (0, 0)))
    w, s, b = params["b4"]
    o4 = _convbn_relu_ref(p, w, s, b, padding=0)
    out = jnp.concatenate([o1, o2, o3, o4], axis=-1)
    return jnp.transpose(out, (0, 3, 1, 2))


if __name__ == "__main__":
    in_dim, out_dim = 4, 4
    mid3, out3 = 4, 8
    mid5, out5 = 4, 8
    pool = 4
    N, H, W = 2, 16, 16

    key = jax.random.PRNGKey(0)
    kx, kp = jax.random.split(key)
    x = jax.random.normal(kx, (N, in_dim, H, W), jnp.float32)
    params = make_inception_params(kp, in_dim, out_dim, mid3, out3,
                                   mid5, out5, pool)
    ops = build_inception_operands(params, W)   # BN folded + banded weights

    forward = make_inception_forward(H, W, in_dim, out_dim, mid3, out3,
                                     mid5, out5, pool)
    out = jax.block_until_ready(forward(x, ops))

    C_total = out_dim + out3 + out5 + pool
    assert out.shape == (N, C_total, H, W), out.shape
    assert out.dtype == jnp.float32
    assert bool(jnp.all(jnp.isfinite(out)))
    assert bool(jnp.all(out >= 0.0))            # ReLU outputs

    ref = inception_reference(x, params)
    max_err = float(jnp.max(jnp.abs(out - ref)))
    assert bool(jnp.allclose(out, ref, atol=2e-2, rtol=2e-2)), max_err

    print("KERNEL_OK")
</pallas_src>

<mosaic_0001>
module attributes {stable_mosaic.version = 11 : i64} {
  func.func @_inception_kernel(%arg0: i32, %arg1: memref<1x16x64xf32, #tpu.memory_space<vmem>>, %arg2: memref<64x216xf32, #tpu.memory_space<vmem>>, %arg3: memref<1x216xf32, #tpu.memory_space<vmem>>, %arg4: memref<3x72x128xf32, #tpu.memory_space<vmem>>, %arg5: memref<1x128xf32, #tpu.memory_space<vmem>>, %arg6: memref<5x80x128xf32, #tpu.memory_space<vmem>>, %arg7: memref<1x128xf32, #tpu.memory_space<vmem>>, %arg8: memref<64x64xf32, #tpu.memory_space<vmem>>, %arg9: memref<1x64xf32, #tpu.memory_space<vmem>>, %arg10: memref<1x16x384xf32, #tpu.memory_space<vmem>>, %arg11: memref<25x72xf32, #tpu.memory_space<vmem>>, %arg12: memref<26x80xf32, #tpu.memory_space<vmem>>, %arg13: memref<25x72xf32, #tpu.memory_space<vmem>>) attributes {dimension_semantics = [#tpu.dimension_semantics<parallel>], iteration_bounds = array<i64: 2>, scalar_prefetch = 0 : i64, scratch_operands = 3 : i64, tpu.core_type = #tpu.core_type<tc>, window_params = [{transform_indices = @transform_0, window_bounds = array<i64: 1, 16, 64>}, {pipeline_mode = #tpu.pipeline_mode<synchronous>, transform_indices = @transform_1, window_bounds = array<i64: 64, 216>}, {pipeline_mode = #tpu.pipeline_mode<synchronous>, transform_indices = @transform_2, window_bounds = array<i64: 1, 216>}, {pipeline_mode = #tpu.pipeline_mode<synchronous>, transform_indices = @transform_3, window_bounds = array<i64: 3, 72, 128>}, {pipeline_mode = #tpu.pipeline_mode<synchronous>, transform_indices = @transform_4, window_bounds = array<i64: 1, 128>}, {pipeline_mode = #tpu.pipeline_mode<synchronous>, transform_indices = @transform_5, window_bounds = array<i64: 5, 80, 128>}, {pipeline_mode = #tpu.pipeline_mode<synchronous>, transform_indices = @transform_6, window_bounds = array<i64: 1, 128>}, {pipeline_mode = #tpu.pipeline_mode<synchronous>, transform_indices = @transform_7, window_bounds = array<i64: 64, 64>}, {pipeline_mode = #tpu.pipeline_mode<synchronous>, transform_indices = @transform_8, window_bounds = array<i64: 1, 64>}, {transform_indices = @transform_9, window_bounds = array<i64: 1, 16, 384>}]} {
    %c0 = arith.constant 0 : index
    %c0_0 = arith.constant 0 : index
    %c0_1 = arith.constant 0 : index
    %0 = vector.load %arg1[%c0, %c0_0, %c0_1] : memref<1x16x64xf32, #tpu.memory_space<vmem>>, vector<1x16x64xf32>
    %1 = vector.shape_cast %0 : vector<1x16x64xf32> to vector<16x64xf32>
    %c0_2 = arith.constant 0 : index
    %c0_3 = arith.constant 0 : index
    %2 = vector.load %arg2[%c0_2, %c0_3] : memref<64x216xf32, #tpu.memory_space<vmem>>, vector<64x216xf32>
    %cst = arith.constant dense<0.000000e+00> : vector<16x216xf32>
    %3 = tpu.matmul %1, %2, %cst {dimension_numbers = #tpu.dot_dimension_numbers<[1], [0], [0], [1], [0, 0, 1, 1], [], []>} : vector<16x64xf32>, vector<64x216xf32>, vector<16x216xf32> -> vector<16x216xf32>
    %c0_4 = arith.constant 0 : index
    %c0_5 = arith.constant 0 : index
    %4 = vector.load %arg3[%c0_4, %c0_5] : memref<1x216xf32, #tpu.memory_space<vmem>>, vector<1x216xf32>
    %5 = vector.broadcast %4 : vector<1x216xf32> to vector<16x216xf32>
    %6 = arith.addf %3, %5 : vector<16x216xf32>
    %cst_6 = arith.constant 0.000000e+00 : f32
    %7 = vector.broadcast %cst_6 : f32 to vector<16x216xf32>
    %8 = arith.maximumf %6, %7 : vector<16x216xf32>
    %9 = vector.extract_strided_slice %8 {offsets = [0, 0], sizes = [16, 64], strides = [1, 1]} : vector<16x216xf32> to vector<16x64xf32>
    %c0_7 = arith.constant 0 : index
    %c0_8 = arith.constant 0 : index
    %c0_9 = arith.constant 0 : index
    %10 = vector.load %arg10[%c0_7, %c0_8, %c0_9] : memref<1x16x384xf32, #tpu.memory_space<vmem>>, vector<1x16x64xf32>
    %11 = vector.shape_cast %10 : vector<1x16x64xf32> to vector<16x64xf32>
    %12 = vector.shape_cast %9 : vector<16x64xf32> to vector<1x16x64xf32>
    tpu.vector_store %arg10[%c0_7, %c0_8, %c0_9], %12 {strides = array<i32>} : memref<1x16x384xf32, #tpu.memory_space<vmem>>, vector<1x16x64xf32>,
    %cst_10 = arith.constant 0.000000e+00 : f32
    %13 = vector.broadcast %cst_10 : f32 to vector<25x72xf32>
    %c0_11 = arith.constant 0 : index
    %c0_12 = arith.constant 0 : index
    %14 = vector.load %arg11[%c0_11, %c0_12] : memref<25x72xf32, #tpu.memory_space<vmem>>, vector<25x72xf32>
    tpu.vector_store %arg11[%c0_11, %c0_12], %13 {strides = array<i32>} : memref<25x72xf32, #tpu.memory_space<vmem>>, vector<25x72xf32>,
    %15 = vector.extract_strided_slice %8 {offsets = [0, 64], sizes = [16, 72], strides = [1, 1]} : vector<16x216xf32> to vector<16x72xf32>
    %c8 = arith.constant 8 : index
    %c0_13 = arith.constant 0 : index
    %16 = vector.load %arg11[%c8, %c0_13] : memref<25x72xf32, #tpu.memory_space<vmem>>, vector<16x72xf32>
    tpu.vector_store %arg11[%c8, %c0_13], %15 {strides = array<i32>} : memref<25x72xf32, #tpu.memory_space<vmem>>, vector<16x72xf32>,
    %cst_14 = arith.constant 0.000000e+00 : f32
    %17 = vector.broadcast %cst_14 : f32 to vector<26x80xf32>
    %c0_15 = arith.constant 0 : index
    %c0_16 = arith.constant 0 : index
    %18 = vector.load %arg12[%c0_15, %c0_16] : memref<26x80xf32, #tpu.memory_space<vmem>>, vector<26x80xf32>
    tpu.vector_store %arg12[%c0_15, %c0_16], %17 {strides = array<i32>} : memref<26x80xf32, #tpu.memory_space<vmem>>, vector<26x80xf32>,
    %19 = vector.extract_strided_slice %8 {offsets = [0, 136], sizes = [16, 80], strides = [1, 1]} : vector<16x216xf32> to vector<16x80xf32>
    %c8_17 = arith.constant 8 : index
    %c0_18 = arith.constant 0 : index
    %20 = vector.load %arg12[%c8_17, %c0_18] : memref<26x80xf32, #tpu.memory_space<vmem>>, vector<16x80xf32>
    tpu.vector_store %arg12[%c8_17, %c0_18], %19 {strides = array<i32>} : memref<26x80xf32, #tpu.memory_space<vmem>>, vector<16x80xf32>,
    %c7 = arith.constant 7 : index
    %c0_19 = arith.constant 0 : index
    %21 = vector.load %arg11[%c7, %c0_19] : memref<25x72xf32, #tpu.memory_space<vmem>>, vector<16x72xf32>
    %c0_20 = arith.constant 0 : index
    %c0_21 = arith.constant 0 : index
    %c0_22 = arith.constant 0 : index
    %22 = vector.load %arg4[%c0_20, %c0_21, %c0_22] : memref<3x72x128xf32, #tpu.memory_space<vmem>>, vector<1x72x128xf32>
    %23 = vector.shape_cast %22 : vector<1x72x128xf32> to vector<72x128xf32>
    %cst_23 = arith.constant dense<0.000000e+00> : vector<16x128xf32>
    %24 = tpu.matmul %21, %23, %cst_23 {dimension_numbers = #tpu.dot_dimension_numbers<[1], [0], [0], [1], [0, 0, 1, 1], [], []>} : vector<16x72xf32>, vector<72x128xf32>, vector<16x128xf32> -> vector<16x128xf32>
    %c8_24 = arith.constant 8 : index
    %c0_25 = arith.constant 0 : index
    %25 = vector.load %arg11[%c8_24, %c0_25] : memref<25x72xf32, #tpu.memory_space<vmem>>, vector<16x72xf32>
    %c1 = arith.constant 1 : index
    %c0_26 = arith.constant 0 : index
    %c0_27 = arith.constant 0 : index
    %26 = vector.load %arg4[%c1, %c0_26, %c0_27] : memref<3x72x128xf32, #tpu.memory_space<vmem>>, vector<1x72x128xf32>
    %27 = vector.shape_cast %26 : vector<1x72x128xf32> to vector<72x128xf32>
    %cst_28 = arith.constant dense<0.000000e+00> : vector<16x128xf32>
    %28 = tpu.matmul %25, %27, %cst_28 {dimension_numbers = #tpu.dot_dimension_numbers<[1], [0], [0], [1], [0, 0, 1, 1], [], []>} : vector<16x72xf32>, vector<72x128xf32>, vector<16x128xf32> -> vector<16x128xf32>
    %29 = arith.addf %24, %28 : vector<16x128xf32>
    %c9 = arith.constant 9 : index
    %c0_29 = arith.constant 0 : index
    %30 = vector.load %arg11[%c9, %c0_29] : memref<25x72xf32, #tpu.memory_space<vmem>>, vector<16x72xf32>
    %c2 = arith.constant 2 : index
    %c0_30 = arith.constant 0 : index
    %c0_31 = arith.constant 0 : index
    %31 = vector.load %arg4[%c2, %c0_30, %c0_31] : memref<3x72x128xf32, #tpu.memory_space<vmem>>, vector<1x72x128xf32>
    %32 = vector.shape_cast %31 : vector<1x72x128xf32> to vector<72x128xf32>
    %cst_32 = arith.constant dense<0.000000e+00> : vector<16x128xf32>
    %33 = tpu.matmul %30, %32, %cst_32 {dimension_numbers = #tpu.dot_dimension_numbers<[1], [0], [0], [1], [0, 0, 1, 1], [], []>} : vector<16x72xf32>, vector<72x128xf32>, vector<16x128xf32> -> vector<16x128xf32>
    %34 = arith.addf %29, %33 : vector<16x128xf32>
    %c0_33 = arith.constant 0 : index
    %c0_34 = arith.constant 0 : index
    %35 = vector.load %arg5[%c0_33, %c0_34] : memref<1x128xf32, #tpu.memory_space<vmem>>, vector<1x128xf32>
    %36 = vector.broadcast %35 : vector<1x128xf32> to vector<16x128xf32>
    %37 = arith.addf %34, %36 : vector<16x128xf32>
    %cst_35 = arith.constant 0.000000e+00 : f32
    %38 = vector.broadcast %cst_35 : f32 to vector<16x128xf32>
    %39 = arith.maximumf %37, %38 : vector<16x128xf32>
    %c0_36 = arith.constant 0 : index
    %c0_37 = arith.constant 0 : index
    %c64 = arith.constant 64 : index
    %40 = vector.load %arg10[%c0_36, %c0_37, %c64] : memref<1x16x384xf32, #tpu.memory_space<vmem>>, vector<1x16x128xf32>
    %41 = vector.shape_cast %40 : vector<1x16x128xf32> to vector<16x128xf32>
    %42 = vector.shape_cast %39 : vector<16x128xf32> to vector<1x16x128xf32>
    tpu.vector_store %arg10[%c0_36, %c0_37, %c64], %42 {strides = array<i32>} : memref<1x16x384xf32, #tpu.memory_space<vmem>>, vector<1x16x128xf32>,
    %c6 = arith.constant 6 : index
    %c0_38 = arith.constant 0 : index
    %43 = vector.load %arg12[%c6, %c0_38] : memref<26x80xf32, #tpu.memory_space<vmem>>, vector<16x80xf32>
    %c0_39 = arith.constant 0 : index
    %c0_40 = arith.constant 0 : index
    %c0_41 = arith.constant 0 : index
    %44 = vector.load %arg6[%c0_39, %c0_40, %c0_41] : memref<5x80x128xf32, #tpu.memory_space<vmem>>, vector<1x80x128xf32>
    %45 = vector.shape_cast %44 : vector<1x80x128xf32> to vector<80x128xf32>
    %cst_42 = arith.constant dense<0.000000e+00> : vector<16x128xf32>
    %46 = tpu.matmul %43, %45, %cst_42 {dimension_numbers = #tpu.dot_dimension_numbers<[1], [0], [0], [1], [0, 0, 1, 1], [], []>} : vector<16x80xf32>, vector<80x128xf32>, vector<16x128xf32> -> vector<16x128xf32>
    %c7_43 = arith.constant 7 : index
    %c0_44 = arith.constant 0 : index
    %47 = vector.load %arg12[%c7_43, %c0_44] : memref<26x80xf32, #tpu.memory_space<vmem>>, vector<16x80xf32>
    %c1_45 = arith.constant 1 : index
    %c0_46 = arith.constant 0 : index
    %c0_47 = arith.constant 0 : index
    %48 = vector.load %arg6[%c1_45, %c0_46, %c0_47] : memref<5x80x128xf32, #tpu.memory_space<vmem>>, vector<1x80x128xf32>
    %49 = vector.shape_cast %48 : vector<1x80x128xf32> to vector<80x128xf32>
    %cst_48 = arith.constant dense<0.000000e+00> : vector<16x128xf32>
    %50 = tpu.matmul %47, %49, %cst_48 {dimension_numbers = #tpu.dot_dimension_numbers<[1], [0], [0], [1], [0, 0, 1, 1], [], []>} : vector<16x80xf32>, vector<80x128xf32>, vector<16x128xf32> -> vector<16x128xf32>
    %51 = arith.addf %46, %50 : vector<16x128xf32>
    %c8_49 = arith.constant 8 : index
    %c0_50 = arith.constant 0 : index
    %52 = vector.load %arg12[%c8_49, %c0_50] : memref<26x80xf32, #tpu.memory_space<vmem>>, vector<16x80xf32>
    %c2_51 = arith.constant 2 : index
    %c0_52 = arith.constant 0 : index
    %c0_53 = arith.constant 0 : index
    %53 = vector.load %arg6[%c2_51, %c0_52, %c0_53] : memref<5x80x128xf32, #tpu.memory_space<vmem>>, vector<1x80x128xf32>
    %54 = vector.shape_cast %53 : vector<1x80x128xf32> to vector<80x128xf32>
    %cst_54 = arith.constant dense<0.000000e+00> : vector<16x128xf32>
    %55 = tpu.matmul %52, %54, %cst_54 {dimension_numbers = #tpu.dot_dimension_numbers<[1], [0], [0], [1], [0, 0, 1, 1], [], []>} : vector<16x80xf32>, vector<80x128xf32>, vector<16x128xf32> -> vector<16x128xf32>
    %56 = arith.addf %51, %55 : vector<16x128xf32>
    %c9_55 = arith.constant 9 : index
    %c0_56 = arith.constant 0 : index
    %57 = vector.load %arg12[%c9_55, %c0_56] : memref<26x80xf32, #tpu.memory_space<vmem>>, vector<16x80xf32>
    %c3 = arith.constant 3 : index
    %c0_57 = arith.constant 0 : index
    %c0_58 = arith.constant 0 : index
    %58 = vector.load %arg6[%c3, %c0_57, %c0_58] : memref<5x80x128xf32, #tpu.memory_space<vmem>>, vector<1x80x128xf32>
    %59 = vector.shape_cast %58 : vector<1x80x128xf32> to vector<80x128xf32>
    %cst_59 = arith.constant dense<0.000000e+00> : vector<16x128xf32>
    %60 = tpu.matmul %57, %59, %cst_59 {dimension_numbers = #tpu.dot_dimension_numbers<[1], [0], [0], [1], [0, 0, 1, 1], [], []>} : vector<16x80xf32>, vector<80x128xf32>, vector<16x128xf32> -> vector<16x128xf32>
    %61 = arith.addf %56, %60 : vector<16x128xf32>
    %c10 = arith.constant 10 : index
    %c0_60 = arith.constant 0 : index
    %62 = vector.load %arg12[%c10, %c0_60] : memref<26x80xf32, #tpu.memory_space<vmem>>, vector<16x80xf32>
    %c4 = arith.constant 4 : index
    %c0_61 = arith.constant 0 : index
    %c0_62 = arith.constant 0 : index
    %63 = vector.load %arg6[%c4, %c0_61, %c0_62] : memref<5x80x128xf32, #tpu.memory_space<vmem>>, vector<1x80x128xf32>
    %64 = vector.shape_cast %63 : vector<1x80x128xf32> to vector<80x128xf32>
    %cst_63 = arith.constant dense<0.000000e+00> : vector<16x128xf32>
    %65 = tpu.matmul %62, %64, %cst_63 {dimension_numbers = #tpu.dot_dimension_numbers<[1], [0], [0], [1], [0, 0, 1, 1], [], []>} : vector<16x80xf32>, vector<80x128xf32>, vector<16x128xf32> -> vector<16x128xf32>
    %66 = arith.addf %61, %65 : vector<16x128xf32>
    %c0_64 = arith.constant 0 : index
    %c0_65 = arith.constant 0 : index
    %67 = vector.load %arg7[%c0_64, %c0_65] : memref<1x128xf32, #tpu.memory_space<vmem>>, vector<1x128xf32>
    %68 = vector.broadcast %67 : vector<1x128xf32> to vector<16x128xf32>
    %69 = arith.addf %66, %68 : vector<16x128xf32>
    %cst_66 = arith.constant 0.000000e+00 : f32
    %70 = vector.broadcast %cst_66 : f32 to vector<16x128xf32>
    %71 = arith.maximumf %69, %70 : vector<16x128xf32>
    %c0_67 = arith.constant 0 : index
    %c0_68 = arith.constant 0 : index
    %c192 = arith.constant 192 : index
    %72 = vector.load %arg10[%c0_67, %c0_68, %c192] : memref<1x16x384xf32, #tpu.memory_space<vmem>>, vector<1x16x128xf32>
    %73 = vector.shape_cast %72 : vector<1x16x128xf32> to vector<16x128xf32>
    %74 = vector.shape_cast %71 : vector<16x128xf32> to vector<1x16x128xf32>
    tpu.vector_store %arg10[%c0_67, %c0_68, %c192], %74 {strides = array<i32>} : memref<1x16x384xf32, #tpu.memory_space<vmem>>, vector<1x16x128xf32>,
    %cst_69 = arith.constant 0xFF800000 : f32
    %75 = vector.broadcast %cst_69 : f32 to vector<25x72xf32>
    %c0_70 = arith.constant 0 : index
    %c0_71 = arith.constant 0 : index
    %76 = vector.load %arg13[%c0_70, %c0_71] : memref<25x72xf32, #tpu.memory_space<vmem>>, vector<25x72xf32>
    tpu.vector_store %arg13[%c0_70, %c0_71], %75 {strides = array<i32>} : memref<25x72xf32, #tpu.memory_space<vmem>>, vector<25x72xf32>,
    %c8_72 = arith.constant 8 : index
    %c4_73 = arith.constant 4 : index
    %77 = vector.load %arg13[%c8_72, %c4_73] : memref<25x72xf32, #tpu.memory_space<vmem>>, vector<16x64xf32>
    tpu.vector_store %arg13[%c8_72, %c4_73], %1 {strides = array<i32>} : memref<25x72xf32, #tpu.memory_space<vmem>>, vector<16x64xf32>,
    %c7_74 = arith.constant 7 : index
    %c0_75 = arith.constant 0 : index
    %78 = vector.load %arg13[%c7_74, %c0_75] : memref<25x72xf32, #tpu.memory_space<vmem>>, vector<16x72xf32>
    %c8_76 = arith.constant 8 : index
    %c0_77 = arith.constant 0 : index
    %79 = vector.load %arg13[%c8_76, %c0_77] : memref<25x72xf32, #tpu.memory_space<vmem>>, vector<16x72xf32>
    %80 = arith.maximumf %78, %79 : vector<16x72xf32>
    %c9_78 = arith.constant 9 : index
    %c0_79 = arith.constant 0 : index
    %81 = vector.load %arg13[%c9_78, %c0_79] : memref<25x72xf32, #tpu.memory_space<vmem>>, vector<16x72xf32>
    %82 = arith.maximumf %80, %81 : vector<16x72xf32>
    %83 = vector.extract_strided_slice %82 {offsets = [0, 0], sizes = [16, 64], strides = [1, 1]} : vector<16x72xf32> to vector<16x64xf32>
    %84 = vector.extract_strided_slice %82 {offsets = [0, 4], sizes = [16, 64], strides = [1, 1]} : vector<16x72xf32> to vector<16x64xf32>
    %85 = arith.maximumf %83, %84 : vector<16x64xf32>
    %86 = vector.extract_strided_slice %82 {offsets = [0, 8], sizes = [16, 64], strides = [1, 1]} : vector<16x72xf32> to vector<16x64xf32>
    %87 = arith.maximumf %85, %86 : vector<16x64xf32>
    %c0_80 = arith.constant 0 : index
    %c0_81 = arith.constant 0 : index
    %88 = vector.load %arg8[%c0_80, %c0_81] : memref<64x64xf32, #tpu.memory_space<vmem>>, vector<64x64xf32>
    %cst_82 = arith.constant dense<0.000000e+00> : vector<16x64xf32>
    %89 = tpu.matmul %87, %88, %cst_82 {dimension_numbers = #tpu.dot_dimension_numbers<[1], [0], [0], [1], [0, 0, 1, 1], [], []>} : vector<16x64xf32>, vector<64x64xf32>, vector<16x64xf32> -> vector<16x64xf32>
    %c0_83 = arith.constant 0 : index
    %c0_84 = arith.constant 0 : index
    %90 = vector.load %arg9[%c0_83, %c0_84] : memref<1x64xf32, #tpu.memory_space<vmem>>, vector<1x64xf32>
    %91 = vector.broadcast %90 : vector<1x64xf32> to vector<16x64xf32>
    %92 = arith.addf %89, %91 : vector<16x64xf32>
    %cst_85 = arith.constant 0.000000e+00 : f32
    %93 = vector.broadcast %cst_85 : f32 to vector<16x64xf32>
    %94 = arith.maximumf %92, %93 : vector<16x64xf32>
    %c0_86 = arith.constant 0 : index
    %c0_87 = arith.constant 0 : index
    %c320 = arith.constant 320 : index
    %95 = vector.load %arg10[%c0_86, %c0_87, %c320] : memref<1x16x384xf32, #tpu.memory_space<vmem>>, vector<1x16x64xf32>
    %96 = vector.shape_cast %95 : vector<1x16x64xf32> to vector<16x64xf32>
    %97 = vector.shape_cast %94 : vector<16x64xf32> to vector<1x16x64xf32>
    tpu.vector_store %arg10[%c0_86, %c0_87, %c320], %97 {strides = array<i32>} : memref<1x16x384xf32, #tpu.memory_space<vmem>>, vector<1x16x64xf32>,
    return
  }
  func.func @transform_0(%arg0: i32) -> (i32, i32, i32) {
    %c0_i32 = arith.constant 0 : i32
    %c0_i32_0 = arith.constant 0 : i32
    %c0_i32_1 = arith.constant 0 : i32
    return %arg0, %c0_i32, %c0_i32_0 : i32, i32, i32
  }
  func.func @transform_1(%arg0: i32) -> (i32, i32) {
    %c0_i32 = arith.constant 0 : i32
    %c0_i32_0 = arith.constant 0 : i32
    %c0_i32_1 = arith.constant 0 : i32
    return %c0_i32, %c0_i32_0 : i32, i32
  }
  func.func @transform_2(%arg0: i32) -> (i32, i32) {
    %c0_i32 = arith.constant 0 : i32
    %c0_i32_0 = arith.constant 0 : i32
    %c0_i32_1 = arith.constant 0 : i32
    return %c0_i32, %c0_i32_0 : i32, i32
  }
  func.func @transform_3(%arg0: i32) -> (i32, i32, i32) {
    %c0_i32 = arith.constant 0 : i32
    %c0_i32_0 = arith.constant 0 : i32
    %c0_i32_1 = arith.constant 0 : i32
    %c0_i32_2 = arith.constant 0 : i32
    return %c0_i32, %c0_i32_0, %c0_i32_1 : i32, i32, i32
  }
  func.func @transform_4(%arg0: i32) -> (i32, i32) {
    %c0_i32 = arith.constant 0 : i32
    %c0_i32_0 = arith.constant 0 : i32
    %c0_i32_1 = arith.constant 0 : i32
    return %c0_i32, %c0_i32_0 : i32, i32
  }
  func.func @transform_5(%arg0: i32) -> (i32, i32, i32) {
    %c0_i32 = arith.constant 0 : i32
    %c0_i32_0 = arith.constant 0 : i32
    %c0_i32_1 = arith.constant 0 : i32
    %c0_i32_2 = arith.constant 0 : i32
    return %c0_i32, %c0_i32_0, %c0_i32_1 : i32, i32, i32
  }
  func.func @transform_6(%arg0: i32) -> (i32, i32) {
    %c0_i32 = arith.constant 0 : i32
    %c0_i32_0 = arith.constant 0 : i32
    %c0_i32_1 = arith.constant 0 : i32
    return %c0_i32, %c0_i32_0 : i32, i32
  }
  func.func @transform_7(%arg0: i32) -> (i32, i32) {
    %c0_i32 = arith.constant 0 : i32
    %c0_i32_0 = arith.constant 0 : i32
    %c0_i32_1 = arith.constant 0 : i32
    return %c0_i32, %c0_i32_0 : i32, i32
  }
  func.func @transform_8(%arg0: i32) -> (i32, i32) {
    %c0_i32 = arith.constant 0 : i32
    %c0_i32_0 = arith.constant 0 : i32
    %c0_i32_1 = arith.constant 0 : i32
    return %c0_i32, %c0_i32_0 : i32, i32
  }
  func.func @transform_9(%arg0: i32) -> (i32, i32, i32) {
    %c0_i32 = arith.constant 0 : i32
    %c0_i32_0 = arith.constant 0 : i32
    %c0_i32_1 = arith.constant 0 : i32
    return %arg0, %c0_i32, %c0_i32_0 : i32, i32, i32
  }
}

</mosaic_0001>

<llo_original>
// kernel: forward.1
$region0: #{forward.1}
  #allocation0 [shape = 'u32[]', space=smem, size = 0x4, offset = 0x4, fixed_abs, tag = 'smem constant byte address 0x4 - core index']
  #allocation1 [shape = 'u32[72,128]{1,0:T(1,128)}', space=vmem, size = 0x9000, scoped, tag = 'internal scratch']
  #allocation2 [shape = 'f32[25,72]{1,0:T(8,128)}', space=vmem, size = 0x4000, scoped, tag = 'scratch operand']
  #allocation3 [shape = 'f32[26,80]{1,0:T(8,128)}', space=vmem, size = 0x4000, scoped, tag = 'scratch operand']
  #allocation4 [shape = 'f32[25,72]{1,0:T(8,128)}', space=vmem, size = 0x4000, scoped, tag = 'scratch operand']
  %s0 = inlined_call_operand.vmem [shape: f32[2,16,64], index: 0, kind: input, shape index: {}]
  %s1 = inlined_call_operand.hbm [shape: f32[64,216], index: 1, kind: input, shape index: {}]
  %s2 = inlined_call_operand.vmem [shape: f32[1,216], index: 2, kind: input, shape index: {}]
  %s3 = inlined_call_operand.hbm [shape: f32[3,72,128], index: 3, kind: input, shape index: {}]
  %s4 = inlined_call_operand.vmem [shape: f32[1,128], index: 4, kind: input, shape index: {}]
  %s5 = inlined_call_operand.vmem [shape: f32[5,80,128], index: 5, kind: input, shape index: {}]
  %s6 = inlined_call_operand.vmem [shape: f32[1,128], index: 6, kind: input, shape index: {}]
  %s7 = inlined_call_operand.hbm [shape: f32[64,64], index: 7, kind: input, shape index: {}]
  %s8 = inlined_call_operand.vmem [shape: f32[1,64], index: 8, kind: input, shape index: {}]
  %s9 = inlined_call_operand.vmem [shape: f32[2,16,384], index: 9, kind: output, shape index: {}]
  %s10 = sld [smem:[#allocation0]]
  $region81: #{forward.1} parent=0
    _
  %s12 = ssub.s32 1, %s10
  %s13 = scalar_select 0, %s12, %s10
  $region1: #{forward.1} parent=0
    #allocation5 [shape = 'u8[65536]{0}', space=vmem, size = 0x10000, scoped, tag = 'input window, operand 1, single buffered']
    #allocation6 [shape = 's32[2]{0}', space=sflag, size = 0x8, scoped, tag = 'scoped memory for forward.1']
    #allocation7 [shape = 'u8[110592]{0}', space=vmem, size = 0x1b000, scoped, tag = 'input window, operand 3, single buffered']
    #allocation8 [shape = 's32[1]{0}', space=sflag, size = 0x4, scoped, tag = 'scoped memory for forward.1']
    #allocation9 [shape = 'u8[32768]{0}', space=vmem, size = 0x8000, scoped, tag = 'input window, operand 7, single buffered']
    %14 = vsyncpa [#allocation6], 0
    %15 = vsyncpa [#allocation8], 0
    loop: start=0, step=1, limit=4
    $region2: #{forward.1} parent=1 // loop_pre_header
      _
    $region3: #{forward.1} parent=1 // loop_header
      %s17 = sphi 0, %s21
      %p18 = scmp.ge.s32.totalorder %s17, 4
      %s27 = sphi 0, %s29
      %s30 = sphi 0, %s27
      %s31 = sphi 0, %s30
      %s47 = sphi 0, %s31
      %s51 = sphi 0, %s51
      %s53 = sphi 0, %s51
      %s54 = sphi 0, %s53
      %s68 = sphi 0, %s54
      %s72 = sphi 0, %s72
      %s74 = sphi 0, %s72
      %s75 = sphi 0, %s74
      %s89 = sphi 0, %s75
      %s93 = sphi 0, %s93
      %s95 = sphi 0, %s93
      %s96 = sphi 0, %s95
      %s110 = sphi 0, %s96
      %s114 = sphi 0, %s114
      %s116 = sphi 0, %s114
      %s117 = sphi 0, %s116
      %s131 = sphi 0, %s117
      %s135 = sphi 0, %s135
      %s137 = sphi 0, %s135
      %s138 = sphi 0, %s137
      %s152 = sphi 0, %s138
      %s156 = sphi 0, %s156
      %s158 = sphi 0, %s156
      %s159 = sphi 0, %s158
      %s173 = sphi 0, %s159
      %s177 = sphi 0, %s177
      %s179 = sphi 0, %s177
      %s180 = sphi 0, %s179
      %s194 = sphi 0, %s180
      %s198 = sphi 0, %s198
      %s200 = sphi 0, %s198
      %s201 = sphi 0, %s200
      %s215 = sphi 0, %s201
      %s221 = sphi 0, %s223
      %s224 = sphi 0, %s221
      %s225 = sphi 0, %s224
      %s241 = sphi 0, %s225
    $region4: #{forward.1} parent=1 // loop_header_branch
      %20 = sbr.rel (%p18) target = $region8
    $region5: #{forward.1} parent=1 // loop_body
      %s22 = ssub.s32 %s17, 1
      %s23 = ssub.s32 %s17, 2
      %s24 = sadd.s32 %s17, 1
      %s25 = ssub.s32 %s17, %s24
      %p26 = scmp.eq.s32.totalorder %s25, 0
      %s28 = sadd.s32 %s27, 1
      %s29 = scalar_select %p26, %s27, %s28
      %p32 = pneg %p26
      %p33 = scmp.eq.s32.totalorder %s17, 1
      %p34 = por %p32, %p33
      %p35 = scmp.ne.s32.totalorder %s27, %s30
      %p36 = scmp.eq.s32.totalorder %s17, 0
      %p37 = por %p35, %p36
      %p38 = scmp.ne.s32.totalorder %s27, %s30
      %p39 = scmp.eq.s32.totalorder %s22, 1
      %p40 = por %p38, %p39
      %p41 = scmp.ne.s32.totalorder %s30, %s31
      %p42 = scmp.eq.s32.totalorder %s22, 0
      %p43 = por %p41, %p42
      %p44 = scmp.ne.s32.totalorder %s30, %s31
      %p45 = scmp.eq.s32.totalorder %s23, 1
      %p46 = por %p44, %p45
      %p48 = scmp.ne.s32.totalorder %s31, %s47
      %p49 = scmp.eq.s32.totalorder %s23, 0
      %p50 = por %p48, %p49
      %s52 = sadd.s32 %s51, 1
      %p55 = scmp.eq.s32.totalorder %s17, 1
      %p56 = scmp.ne.s32.totalorder %s51, %s53
      %p57 = scmp.eq.s32.totalorder %s17, 0
      %p58 = por %p56, %p57
      %p59 = scmp.ne.s32.totalorder %s51, %s53
      %p60 = scmp.eq.s32.totalorder %s22, 1
      %p61 = por %p59, %p60
      %p62 = scmp.ne.s32.totalorder %s53, %s54
      %p63 = scmp.eq.s32.totalorder %s22, 0
      %p64 = por %p62, %p63
      %p65 = scmp.ne.s32.totalorder %s53, %s54
      %p66 = scmp.eq.s32.totalorder %s23, 1
      %p67 = por %p65, %p66
      %p69 = scmp.ne.s32.totalorder %s54, %s68
      %p70 = scmp.eq.s32.totalorder %s23, 0
      %p71 = por %p69, %p70
      %s73 = sadd.s32 %s72, 1
      %p76 = scmp.eq.s32.totalorder %s17, 1
      %p77 = scmp.ne.s32.totalorder %s72, %s74
      %p78 = scmp.eq.s32.totalorder %s17, 0
      %p79 = por %p77, %p78
      %p80 = scmp.ne.s32.totalorder %s72, %s74
      %p81 = scmp.eq.s32.totalorder %s22, 1
      %p82 = por %p80, %p81
      %p83 = scmp.ne.s32.totalorder %s74, %s75
      %p84 = scmp.eq.s32.totalorder %s22, 0
      %p85 = por %p83, %p84
      %p86 = scmp.ne.s32.totalorder %s74, %s75
      %p87 = scmp.eq.s32.totalorder %s23, 1
      %p88 = por %p86, %p87
      %p90 = scmp.ne.s32.totalorder %s75, %s89
      %p91 = scmp.eq.s32.totalorder %s23, 0
      %p92 = por %p90, %p91
      %s94 = sadd.s32 %s93, 1
      %p97 = scmp.eq.s32.totalorder %s17, 1
      %p98 = scmp.ne.s32.totalorder %s93, %s95
      %p99 = scmp.eq.s32.totalorder %s17, 0
      %p100 = por %p98, %p99
      %p101 = scmp.ne.s32.totalorder %s93, %s95
      %p102 = scmp.eq.s32.totalorder %s22, 1
      %p103 = por %p101, %p102
      %p104 = scmp.ne.s32.totalorder %s95, %s96
      %p105 = scmp.eq.s32.totalorder %s22, 0
      %p106 = por %p104, %p105
      %p107 = scmp.ne.s32.totalorder %s95, %s96
      %p108 = scmp.eq.s32.totalorder %s23, 1
      %p109 = por %p107, %p108
      %p111 = scmp.ne.s32.totalorder %s96, %s110
      %p112 = scmp.eq.s32.totalorder %s23, 0
      %p113 = por %p111, %p112
      %s115 = sadd.s32 %s114, 1
      %p118 = scmp.eq.s32.totalorder %s17, 1
      %p119 = scmp.ne.s32.totalorder %s114, %s116
      %p120 = scmp.eq.s32.totalorder %s17, 0
      %p121 = por %p119, %p120
      %p122 = scmp.ne.s32.totalorder %s114, %s116
      %p123 = scmp.eq.s32.totalorder %s22, 1
      %p124 = por %p122, %p123
      %p125 = scmp.ne.s32.totalorder %s116, %s117
      %p126 = scmp.eq.s32.totalorder %s22, 0
      %p127 = por %p125, %p126
      %p128 = scmp.ne.s32.totalorder %s116, %s117
      %p129 = scmp.eq.s32.totalorder %s23, 1
      %p130 = por %p128, %p129
      %p132 = scmp.ne.s32.totalorder %s117, %s131
      %p133 = scmp.eq.s32.totalorder %s23, 0
      %p134 = por %p132, %p133
      %s136 = sadd.s32 %s135, 1
      %p139 = scmp.eq.s32.totalorder %s17, 1
      %p140 = scmp.ne.s32.totalorder %s135, %s137
      %p141 = scmp.eq.s32.totalorder %s17, 0
      %p142 = por %p140, %p141
      %p143 = scmp.ne.s32.totalorder %s135, %s137
      %p144 = scmp.eq.s32.totalorder %s22, 1
      %p145 = por %p143, %p144
      %p146 = scmp.ne.s32.totalorder %s137, %s138
      %p147 = scmp.eq.s32.totalorder %s22, 0
      %p148 = por %p146, %p147
      %p149 = scmp.ne.s32.totalorder %s137, %s138
      %p150 = scmp.eq.s32.totalorder %s23, 1
      %p151 = por %p149, %p150
      %p153 = scmp.ne.s32.totalorder %s138, %s152
      %p154 = scmp.eq.s32.totalorder %s23, 0
      %p155 = por %p153, %p154
      %s157 = sadd.s32 %s156, 1
      %p160 = scmp.eq.s32.totalorder %s17, 1
      %p161 = scmp.ne.s32.totalorder %s156, %s158
      %p162 = scmp.eq.s32.totalorder %s17, 0
      %p163 = por %p161, %p162
      %p164 = scmp.ne.s32.totalorder %s156, %s158
      %p165 = scmp.eq.s32.totalorder %s22, 1
      %p166 = por %p164, %p165
      %p167 = scmp.ne.s32.totalorder %s158, %s159
      %p168 = scmp.eq.s32.totalorder %s22, 0
      %p169 = por %p167, %p168
      %p170 = scmp.ne.s32.totalorder %s158, %s159
      %p171 = scmp.eq.s32.totalorder %s23, 1
      %p172 = por %p170, %p171
      %p174 = scmp.ne.s32.totalorder %s159, %s173
      %p175 = scmp.eq.s32.totalorder %s23, 0
      %p176 = por %p174, %p175
      %s178 = sadd.s32 %s177, 1
      %p181 = scmp.eq.s32.totalorder %s17, 1
      %p182 = scmp.ne.s32.totalorder %s177, %s179
      %p183 = scmp.eq.s32.totalorder %s17, 0
      %p184 = por %p182, %p183
      %p185 = scmp.ne.s32.totalorder %s177, %s179
      %p186 = scmp.eq.s32.totalorder %s22, 1
      %p187 = por %p185, %p186
      %p188 = scmp.ne.s32.totalorder %s179, %s180
      %p189 = scmp.eq.s32.totalorder %s22, 0
      %p190 = por %p188, %p189
      %p191 = scmp.ne.s32.totalorder %s179, %s180
      %p192 = scmp.eq.s32.totalorder %s23, 1
      %p193 = por %p191, %p192
      %p195 = scmp.ne.s32.totalorder %s180, %s194
      %p196 = scmp.eq.s32.totalorder %s23, 0
      %p197 = por %p195, %p196
      %s199 = sadd.s32 %s198, 1
      %p202 = scmp.eq.s32.totalorder %s17, 1
      %p203 = scmp.ne.s32.totalorder %s198, %s200
      %p204 = scmp.eq.s32.totalorder %s17, 0
      %p205 = por %p203, %p204
      %p206 = scmp.ne.s32.totalorder %s198, %s200
      %p207 = scmp.eq.s32.totalorder %s22, 1
      %p208 = por %p206, %p207
      %p209 = scmp.ne.s32.totalorder %s200, %s201
      %p210 = scmp.eq.s32.totalorder %s22, 0
      %p211 = por %p209, %p210
      %p212 = scmp.ne.s32.totalorder %s200, %s201
      %p213 = scmp.eq.s32.totalorder %s23, 1
      %p214 = por %p212, %p213
      %p216 = scmp.ne.s32.totalorder %s201, %s215
      %p217 = scmp.eq.s32.totalorder %s23, 0
      %p218 = por %p216, %p217
      %s219 = ssub.s32 %s17, %s24
      %p220 = scmp.eq.s32.totalorder %s219, 0
      %s222 = sadd.s32 %s221, 1
      %s223 = scalar_select %p220, %s221, %s222
      %p226 = pneg %p220
      %p227 = scmp.eq.s32.totalorder %s17, 1
      %p228 = por %p226, %p227
      %p229 = scmp.ne.s32.totalorder %s221, %s224
      %p230 = scmp.eq.s32.totalorder %s17, 0
      %p231 = por %p229, %p230
      %p232 = scmp.ne.s32.totalorder %s221, %s224
      %p233 = scmp.eq.s32.totalorder %s22, 1
      %p234 = por %p232, %p233
      %p235 = scmp.ne.s32.totalorder %s224, %s225
      %p236 = scmp.eq.s32.totalorder %s22, 0
      %p237 = por %p235, %p236
      %p238 = scmp.ne.s32.totalorder %s224, %s225
      %p239 = scmp.eq.s32.totalorder %s23, 1
      %p240 = por %p238, %p239
      %p242 = scmp.ne.s32.totalorder %s225, %s241
      %p243 = scmp.eq.s32.totalorder %s23, 0
      %p244 = por %p242, %p243
      %p245 = scmp.le.s32.totalorder 1, %s17
      %p246 = scmp.lt.s32.totalorder %s17, 3
      %p247 = pnand %p245, %p246
      %p248 = pneg %p247
      // Predicated region
      $region9: #{forward.1} parent=5 // pred_check
        _
      $region10: #{forward.1} parent=5 // pred_check_branch
        %250 = sbr.rel (%p247) target = $region12
      $region11: #{forward.1} parent=5 // pred_region
        %s251 = ssub.s32 %s17, 1
        // Predicated region
        $region13: #{forward.1} parent=11 // pred_check
          %p252 = pneg %p64
        $region14: #{forward.1} parent=11 // pred_check_branch
          %254 = sbr.rel (%p252) target = $region16
        $region15: #{forward.1} parent=11 // pred_region
          %256 = vsyncadd [#allocation6], 0
          %s257 = sshll.u32 %s1, 4
          %s258 = int_to_ptr.hbm [resolvable:$true] %s257
          %s259 = sshll.u32 [#allocation5], 4
          %s260 = int_to_ptr.vmem [resolvable:$true] %s259
          %265 = dma.hbm_to_vmem [thread:$0]  %s258, 2048, %s260, [#allocation6], 256, 256, 16
        $region16: #{forward.1} parent=11 // pred_fallthru
          _
        // Predicated region
        $region17: #{forward.1} parent=11 // pred_check
          %p266 = pneg %p85
        $region18: #{forward.1} parent=11 // pred_check_branch
          %268 = sbr.rel (%p266) target = $region20
        $region19: #{forward.1} parent=11 // pred_region
          _
        $region20: #{forward.1} parent=11 // pred_fallthru
          _
        // Predicated region
        $region21: #{forward.1} parent=11 // pred_check
          %p269 = pneg %p106
        $region22: #{forward.1} parent=11 // pred_check_branch
          %271 = sbr.rel (%p269) target = $region24
        $region23: #{forward.1} parent=11 // pred_region
          %273 = vsyncadd [#allocation8], 0
          %s274 = sshll.u32 %s3, 4
          %s275 = int_to_ptr.hbm [resolvable:$true] %s274
          %s276 = sshll.u32 [#allocation7], 4
          %s277 = int_to_ptr.vmem [resolvable:$true] %s276
          %282 = dma.hbm_to_vmem [thread:$0]  %s275, 3456, %s277, [#allocation8], 128, 128, 8
        $region24: #{forward.1} parent=11 // pred_fallthru
          _
        // Predicated region
        $region25: #{forward.1} parent=11 // pred_check
          %p283 = pneg %p127
        $region26: #{forward.1} parent=11 // pred_check_branch
          %285 = sbr.rel (%p283) target = $region28
        $region27: #{forward.1} parent=11 // pred_region
          _
        $region28: #{forward.1} parent=11 // pred_fallthru
          _
        // Predicated region
        $region29: #{forward.1} parent=11 // pred_check
          %p286 = pneg %p148
        $region30: #{forward.1} parent=11 // pred_check_branch
          %288 = sbr.rel (%p286) target = $region32
        $region31: #{forward.1} parent=11 // pred_region
          _
        $region32: #{forward.1} parent=11 // pred_fallthru
          _
        // Predicated region
        $region33: #{forward.1} parent=11 // pred_check
          %p289 = pneg %p169
        $region34: #{forward.1} parent=11 // pred_check_branch
          %291 = sbr.rel (%p289) target = $region36
        $region35: #{forward.1} parent=11 // pred_region
          _
        $region36: #{forward.1} parent=11 // pred_fallthru
          _
        // Predicated region
        $region37: #{forward.1} parent=11 // pred_check
          %p292 = pneg %p190
        $region38: #{forward.1} parent=11 // pred_check_branch
          %294 = sbr.rel (%p292) target = $region40
        $region39: #{forward.1} parent=11 // pred_region
          %296 = vsyncadd [#allocation8], 0
          %s297 = sshll.u32 %s7, 4
          %s298 = int_to_ptr.hbm [resolvable:$true] %s297
          %s299 = sshll.u32 [#allocation9], 4
          %s300 = int_to_ptr.vmem [resolvable:$true] %s299
          %305 = dma.hbm_to_vmem [thread:$0]  %s298, 1024, %s300, [#allocation8], 128, 128, 8
        $region40: #{forward.1} parent=11 // pred_fallthru
          _
        // Predicated region
        $region41: #{forward.1} parent=11 // pred_check
          %p306 = pneg %p211
        $region42: #{forward.1} parent=11 // pred_check_branch
          %308 = sbr.rel (%p306) target = $region44
        $region43: #{forward.1} parent=11 // pred_region
          _
        $region44: #{forward.1} parent=11 // pred_fallthru
          _
      $region12: #{forward.1} parent=5 // pred_fallthru
        _
      %p309 = scmp.lt.s32.totalorder %s17, 2
      // Predicated region
      $region45: #{forward.1} parent=5 // pred_check
        %p310 = pneg %p309
      $region46: #{forward.1} parent=5 // pred_check_branch
        %312 = sbr.rel (%p310) target = $region48
      $region47: #{forward.1} parent=5 // pred_region
        // Predicated region
        $region49: #{forward.1} parent=47 // pred_check
          %p313 = pneg %p37
        $region50: #{forward.1} parent=47 // pred_check_branch
          %315 = sbr.rel (%p313) target = $region52
        $region51: #{forward.1} parent=47 // pred_region
          %p316 = scmp.lt.s32.totalorder %s17, 1
          %s317 = scalar_select %p316, %s17, 1
          %s318 = smul.addr %s317, 2
          %s319 = smul.addr %s318, 8
          %s320 = scalar_lea.vmem %s0, %s319
        $region52: #{forward.1} parent=47 // pred_fallthru
          _
      $region48: #{forward.1} parent=5 // pred_fallthru
        _
      %p321 = scmp.le.s32.totalorder 1, %s17
      %p322 = scmp.lt.s32.totalorder %s17, 3
      %p323 = pnand %p321, %p322
      %p324 = pneg %p323
      // Predicated region
      $region53: #{forward.1} parent=5 // pred_check
        _
      $region54: #{forward.1} parent=5 // pred_check_branch
        %326 = sbr.rel (%p323) target = $region56
      $region55: #{forward.1} parent=5 // pred_region
        %s327 = ssub.s32 %s17, 1
        // Predicated region
        $region57: #{forward.1} parent=55 // pred_check
          %p328 = pneg %p64
        $region58: #{forward.1} parent=55 // pred_check_branch
          %330 = sbr.rel (%p328) target = $region60
        $region59: #{forward.1} parent=55 // pred_region
          %332 = dma.done [#allocation6], 2048
        $region60: #{forward.1} parent=55 // pred_fallthru
          _
        // Predicated region
        $region61: #{forward.1} parent=55 // pred_check
          %p333 = pneg %p106
        $region62: #{forward.1} parent=55 // pred_check_branch
          %335 = sbr.rel (%p333) target = $region64
        $region63: #{forward.1} parent=55 // pred_region
          %337 = dma.done [#allocation8], 3456
        $region64: #{forward.1} parent=55 // pred_fallthru
          _
        // Predicated region
        $region65: #{forward.1} parent=55 // pred_check
          %p338 = pneg %p190
        $region66: #{forward.1} parent=55 // pred_check_branch
          %340 = sbr.rel (%p338) target = $region68
        $region67: #{forward.1} parent=55 // pred_region
          %342 = dma.done [#allocation8], 1024
        $region68: #{forward.1} parent=55 // pred_fallthru
          _
        %p343 = scmp.lt.s32.totalorder %s22, 1
        %s344 = scalar_select %p343, %s22, 1
        %s345 = smul.addr %s344, 2
        %s346 = smul.addr %s345, 8
        %s347 = scalar_lea.vmem %s0, %s346
        %p348 = pneg %p43
        %p349 = pneg %p40
        %p350 = pneg %p64
        %p351 = pneg %p61
        %p352 = pneg %p85
        %p353 = pneg %p82
        %p354 = pneg %p106
        %p355 = pneg %p103
        %p356 = pneg %p127
        %p357 = pneg %p124
        %p358 = pneg %p148
        %p359 = pneg %p145
        %p360 = pneg %p169
        %p361 = pneg %p166
        %p362 = pneg %p190
        %p363 = pneg %p187
        %p364 = pneg %p211
        %p365 = pneg %p208
        %p366 = pneg %p237
        %p367 = pneg %p234
        %p368 = scmp.lt.s32.totalorder %s22, 1
        %s369 = scalar_select %p368, %s22, 1
        %s370 = smul.addr %s369, 6
        %s371 = smul.addr %s370, 8
        %s372 = scalar_lea.vmem %s9, %s371
        %p373 = scmp.lt.s32.totalorder %s22, 1
        %s374 = scalar_select %p373, %s22, 1
        %s375 = smul.addr %s374, 2
        %s376 = smul.addr %s375, 8
        %s377 = scalar_lea.vmem %s0, %s376
        %p378 = scmp.lt.s32.totalorder %s22, 1
        %s379 = scalar_select %p378, %s22, 1
        %s380 = smul.addr %s379, 6
        %s381 = smul.addr %s380, 8
        %s382 = scalar_lea.vmem %s9, %s381
        %v383 = vld [vmem:[%s377] sm:$0xff]
        %v384 = vld [vmem:[%s377 + $0x8] sm:$0xff]
        %v385 = vld [vmem:[#allocation5] sm:$0xff]
        %v386 = vld [vmem:[#allocation5 + $0x8] sm:$0xff]
        %v387 = vld [vmem:[#allocation5 + $0x10] sm:$0xff]
        %v388 = vld [vmem:[#allocation5 + $0x18] sm:$0xff]
        %v389 = vld [vmem:[#allocation5 + $0x20] sm:$0xff]
        %v390 = vld [vmem:[#allocation5 + $0x28] sm:$0xff]
        %v391 = vld [vmem:[#allocation5 + $0x30] sm:$0xff]
        %v392 = vld [vmem:[#allocation5 + $0x38] sm:$0xff]
        %v393 = vld [vmem:[#allocation5 + $0x40] sm:$0xff]
        %v394 = vld [vmem:[#allocation5 + $0x48] sm:$0xff]
        %v395 = vld [vmem:[#allocation5 + $0x50] sm:$0xff]
        %v396 = vld [vmem:[#allocation5 + $0x58] sm:$0xff]
        %v397 = vld [vmem:[#allocation5 + $0x60] sm:$0xff]
        %v398 = vld [vmem:[#allocation5 + $0x68] sm:$0xff]
        %v399 = vld [vmem:[#allocation5 + $0x70] sm:$0xff]
        %v400 = vld [vmem:[#allocation5 + $0x78] sm:$0xff]
        %v401 = vld [vmem:[%s2] sm:$0x3]
        %v403 = vperm.slane %v401, 0
        %v404 = vperm.slane %v401, 1
        %vm407 = vcmask 523264
        %v409 = vsel %vm407, %v383, 0
        %v412 = vsel %vm407, %v384, 0
        %414 = vmatpush.msra.mxu0 0.0
        %415 = vmatpush.msra.mxu0 0.0
        %416 = vmatpush.msra.mxu0 0.0
        %417 = vmatpush.msra.mxu0 0.0
        %418 = vmatpush.msra.mxu0 0.0
        %419 = vmatpush.msra.mxu0 0.0
        %420 = vmatpush.msra.mxu0 0.0
        %421 = vmatpush.msra.mxu0 0.0
        %422 = vmatpush.msra.mxu0 %v399
        %423 = vmatpush.msra.mxu0 %v397
        %424 = vmatpush.msra.mxu0 %v395
        %425 = vmatpush.msra.mxu0 %v393
        %426 = vmatpush.msra.mxu0 %v391
        %427 = vmatpush.msra.mxu0 %v389
        %428 = vmatpush.msra.mxu0 %v387
        %429 = vmatpush.msra.mxu0 %v385
        %430 = vmatmul.f32.gmra.mxu0 %v409
        %v431 = vpop.f32.mrf.mxu0
        %v432 = vadd.f32 %v403, %v431
        %433 = vmatmul.f32.gmra.mxu0 %v412
        %v434 = vpop.f32.mrf.mxu0
        %v435 = vadd.f32 %v403, %v434
        %436 = vdwg.mxu0
        %437 = vmatpush.msra.mxu0 0.0
        %438 = vmatpush.msra.mxu0 0.0
        %439 = vmatpush.msra.mxu0 0.0
        %440 = vmatpush.msra.mxu0 0.0
        %441 = vmatpush.msra.mxu0 0.0
        %442 = vmatpush.msra.mxu0 0.0
        %443 = vmatpush.msra.mxu0 0.0
        %444 = vmatpush.msra.mxu0 0.0
        %445 = vmatpush.msra.mxu0 %v400
        %446 = vmatpush.msra.mxu0 %v398
        %447 = vmatpush.msra.mxu0 %v396
        %448 = vmatpush.msra.mxu0 %v394
        %449 = vmatpush.msra.mxu0 %v392
        %450 = vmatpush.msra.mxu0 %v390
        %451 = vmatpush.msra.mxu0 %v388
        %452 = vmatpush.msra.mxu0 %v386
        %453 = vmatmul.f32.gmra.mxu0 %v409
        %v454 = vpop.f32.mrf.mxu0
        %v455 = vadd.f32 %v404, %v454
        %456 = vmatmul.f32.gmra.mxu0 %v412
        %v457 = vpop.f32.mrf.mxu0
        %v458 = vadd.f32 %v404, %v457
        %459 = vdwg.mxu0
        %v460 = vmax.f32 %v432, 0.0
        %v461 = vmax.f32 %v455, 0.0
        %v462 = vmax.f32 %v435, 0.0
        %v463 = vmax.f32 %v458, 0.0
        %464 = vst.msk [vmem:[%s382] sm:$0xff] %vm407, %v460
        %465 = vst.msk [vmem:[%s382 + $0x18] sm:$0xff] %vm407, %v462
        %vm466 = vcmask 588800
        %467 = vst.msk [vmem:[#allocation2] sm:$0xff] %vm466, 0.0
        %468 = vst.msk [vmem:[#allocation2 + $0x8] sm:$0xff] %vm466, 0.0
        %469 = vst.msk [vmem:[#allocation2 + $0x10] sm:$0xff] %vm466, 0.0
        %vm470 = vcmask 581632
        %471 = vst.msk [vmem:[#allocation2 + $0x18] sm:$0x1] %vm470, 0.0
        %476 = vrot.lane.b32.xlu0 %v460, 64
        %v477 = vpop.permute.xlu0 %476
        %478 = vrot.lane.b32.xlu0 %v461, 64
        %v479 = vpop.permute.xlu0 %478
        %480 = vrot.lane.b32.xlu0 %v462, 64
        %v481 = vpop.permute.xlu0 %480
        %482 = vrot.lane.b32.xlu0 %v463, 64
        %v483 = vpop.permute.xlu0 %482
        %v484 = vsel %vm407, %v477, %v479
        %v485 = vsel %vm407, %v481, %v483
        %488 = vst.msk [vmem:[#allocation2 + $0x8] sm:$0xff] %vm466, %v484
        %489 = vst.msk [vmem:[#allocation2 + $0x10] sm:$0xff] %vm466, %v485
        %vm490 = vcmask 654336
        %491 = vst.msk [vmem:[#allocation3] sm:$0xff] %vm490, 0.0
        %492 = vst.msk [vmem:[#allocation3 + $0x8] sm:$0xff] %vm490, 0.0
        %493 = vst.msk [vmem:[#allocation3 + $0x10] sm:$0xff] %vm490, 0.0
        %vm494 = vcmask 648192
        %495 = vst.msk [vmem:[#allocation3 + $0x18] sm:$0x3] %vm494, 0.0
        %496 = vrot.lane.b32.xlu0 %v461, 120
        %v497 = vpop.permute.xlu0 %496
        %498 = vrot.lane.b32.xlu0 %v463, 120
        %v499 = vpop.permute.xlu0 %498
        %502 = vst.msk [vmem:[#allocation3 + $0x8] sm:$0xff] %vm490, %v497
        %503 = vst.msk [vmem:[#allocation3 + $0x10] sm:$0xff] %vm490, %v499
        %v504 = vld [vmem:[#allocation2 + $0x7] sm:$0xff]
        %v505 = vld [vmem:[#allocation2 + $0xf] sm:$0xff]
        %v506 = vld [vmem:[#allocation7] sm:$0xff]
        %v507 = vld [vmem:[#allocation7 + $0x8] sm:$0xff]
        %v508 = vld [vmem:[#allocation7 + $0x10] sm:$0xff]
        %v509 = vld [vmem:[#allocation7 + $0x18] sm:$0xff]
        %v510 = vld [vmem:[#allocation7 + $0x20] sm:$0xff]
        %v511 = vld [vmem:[#allocation7 + $0x28] sm:$0xff]
        %v512 = vld [vmem:[#allocation7 + $0x30] sm:$0xff]
        %v513 = vld [vmem:[#allocation7 + $0x38] sm:$0xff]
        %v514 = vld [vmem:[#allocation7 + $0x40] sm:$0xff]
        %v515 = vld [vmem:[#allocation2 + $0x8] sm:$0xff]
        %v516 = vld [vmem:[#allocation2 + $0x10] sm:$0xff]
        %s517 = scalar_lea.vmem [#allocation7], 72
        %v518 = vld [vmem:[%s517] sm:$0xff]
        %v519 = vld [vmem:[%s517 + $0x8] sm:$0xff]
        %v520 = vld [vmem:[%s517 + $0x10] sm:$0xff]
        %v521 = vld [vmem:[%s517 + $0x18] sm:$0xff]
        %v522 = vld [vmem:[%s517 + $0x20] sm:$0xff]
        %v523 = vld [vmem:[%s517 + $0x28] sm:$0xff]
        %v524 = vld [vmem:[%s517 + $0x30] sm:$0xff]
        %v525 = vld [vmem:[%s517 + $0x38] sm:$0xff]
        %v526 = vld [vmem:[%s517 + $0x40] sm:$0xff]
        %v528 = vsel %vm466, %v515, 0
        %v531 = vsel %vm466, %v516, 0
        %533 = vmatpush.msra.mxu0 0.0
        %534 = vmatpush.msra.mxu0 0.0
        %535 = vmatpush.msra.mxu0 0.0
        %536 = vmatpush.msra.mxu0 0.0
        %537 = vmatpush.msra.mxu0 0.0
        %538 = vmatpush.msra.mxu0 0.0
        %539 = vmatpush.msra.mxu0 0.0
        %540 = vmatpush.msra.mxu0 %v526
        %541 = vmatpush.msra.mxu0 %v525
        %542 = vmatpush.msra.mxu0 %v524
        %543 = vmatpush.msra.mxu0 %v523
        %544 = vmatpush.msra.mxu0 %v522
        %545 = vmatpush.msra.mxu0 %v521
        %546 = vmatpush.msra.mxu0 %v520
        %547 = vmatpush.msra.mxu0 %v519
        %548 = vmatpush.msra.mxu0 %v518
        %549 = vmatmul.f32.gmra.mxu0 %v528
        %v550 = vpop.f32.mrf.mxu0
        %v551 = vadd.f32 0.0, %v550
        %552 = vmatmul.f32.gmra.mxu0 %v531
        %v553 = vpop.f32.mrf.mxu0
        %v554 = vadd.f32 0.0, %v553
        %555 = vdwg.mxu0
        %v557 = vsel %vm466, %v504, 0
        %v560 = vsel %vm466, %v505, 0
        %562 = vmatpush.msra.mxu0 0.0
        %563 = vmatpush.msra.mxu0 0.0
        %564 = vmatpush.msra.mxu0 0.0
        %565 = vmatpush.msra.mxu0 0.0
        %566 = vmatpush.msra.mxu0 0.0
        %567 = vmatpush.msra.mxu0 0.0
        %568 = vmatpush.msra.mxu0 0.0
        %569 = vmatpush.msra.mxu0 %v514
        %570 = vmatpush.msra.mxu0 %v513
        %571 = vmatpush.msra.mxu0 %v512
        %572 = vmatpush.msra.mxu0 %v511
        %573 = vmatpush.msra.mxu0 %v510
        %574 = vmatpush.msra.mxu0 %v509
        %575 = vmatpush.msra.mxu0 %v508
        %576 = vmatpush.msra.mxu0 %v507
        %577 = vmatpush.msra.mxu0 %v506
        %578 = vmatmul.f32.gmra.mxu0 %v557
        %v579 = vpop.f32.mrf.mxu0
        %v580 = vadd.f32 %v551, %v579
        %581 = vmatmul.f32.gmra.mxu0 %v560
        %v582 = vpop.f32.mrf.mxu0
        %v583 = vadd.f32 %v554, %v582
        %584 = vdwg.mxu0
        %v585 = vld [vmem:[#allocation2 + $0x9] sm:$0xff]
        %v586 = vld [vmem:[#allocation2 + $0x11] sm:$0xff]
        %s587 = scalar_lea.vmem [#allocation7], 144
        %v588 = vld [vmem:[%s587] sm:$0xff]
        %v589 = vld [vmem:[%s587 + $0x8] sm:$0xff]
        %v590 = vld [vmem:[%s587 + $0x10] sm:$0xff]
        %v591 = vld [vmem:[%s587 + $0x18] sm:$0xff]
        %v592 = vld [vmem:[%s587 + $0x20] sm:$0xff]
        %v593 = vld [vmem:[%s587 + $0x28] sm:$0xff]
        %v594 = vld [vmem:[%s587 + $0x30] sm:$0xff]
        %v595 = vld [vmem:[%s587 + $0x38] sm:$0xff]
        %v596 = vld [vmem:[%s587 + $0x40] sm:$0xff]
        %v598 = vsel %vm466, %v585, 0
        %v601 = vsel %vm466, %v586, 0
        %603 = vmatpush.msra.mxu0 0.0
        %604 = vmatpush.msra.mxu0 0.0
        %605 = vmatpush.msra.mxu0 0.0
        %606 = vmatpush.msra.mxu0 0.0
        %607 = vmatpush.msra.mxu0 0.0
        %608 = vmatpush.msra.mxu0 0.0
        %609 = vmatpush.msra.mxu0 0.0
        %610 = vmatpush.msra.mxu0 %v596
        %611 = vmatpush.msra.mxu0 %v595
        %612 = vmatpush.msra.mxu0 %v594
        %613 = vmatpush.msra.mxu0 %v593
        %614 = vmatpush.msra.mxu0 %v592
        %615 = vmatpush.msra.mxu0 %v591
        %616 = vmatpush.msra.mxu0 %v590
        %617 = vmatpush.msra.mxu0 %v589
        %618 = vmatpush.msra.mxu0 %v588
        %619 = vmatmul.f32.gmra.mxu0 %v598
        %v620 = vpop.f32.mrf.mxu0
        %v621 = vadd.f32 0.0, %v620
        %622 = vmatmul.f32.gmra.mxu0 %v601
        %v623 = vpop.f32.mrf.mxu0
        %v624 = vadd.f32 0.0, %v623
        %625 = vdwg.mxu0
        %v626 = vadd.f32 %v580, %v621
        %v627 = vadd.f32 %v583, %v624
        %v628 = vld [vmem:[%s4] sm:$0x1]
        %v630 = vperm.slane %v628, 0
        %v632 = vadd.f32 %v626, %v630
        %v633 = vadd.f32 %v627, %v630
        %v634 = vmax.f32 %v632, 0.0
        %v635 = vmax.f32 %v633, 0.0
        %638 = vrot.lane.b32.xlu0 %v634, 64
        %v639 = vpop.permute.xlu0 %638
        %640 = vrot.lane.b32.xlu0 %v635, 64
        %v641 = vpop.permute.xlu0 %640
        %vm644 = vcmask 1048064
        %645 = vst.msk [vmem:[%s382] sm:$0xff] %vm644, %v639
        %646 = vst.msk [vmem:[%s382 + $0x8] sm:$0xff] %vm407, %v639
        %647 = vst.msk [vmem:[%s382 + $0x18] sm:$0xff] %vm644, %v641
        %648 = vst.msk [vmem:[%s382 + $0x20] sm:$0xff] %vm407, %v641
        %v649 = vld [vmem:[#allocation3 + $0x6] sm:$0xff]
        %v650 = vld [vmem:[#allocation3 + $0xe] sm:$0xff]
        %v651 = vld [vmem:[%s5] sm:$0xff]
        %v652 = vld [vmem:[%s5 + $0x8] sm:$0xff]
        %v653 = vld [vmem:[%s5 + $0x10] sm:$0xff]
        %v654 = vld [vmem:[%s5 + $0x18] sm:$0xff]
        %v655 = vld [vmem:[%s5 + $0x20] sm:$0xff]
        %v656 = vld [vmem:[%s5 + $0x28] sm:$0xff]
        %v657 = vld [vmem:[%s5 + $0x30] sm:$0xff]
        %v658 = vld [vmem:[%s5 + $0x38] sm:$0xff]
        %v659 = vld [vmem:[%s5 + $0x40] sm:$0xff]
        %v660 = vld [vmem:[%s5 + $0x48] sm:$0xff]
        %v661 = vld [vmem:[#allocation3 + $0x7] sm:$0xff]
        %v662 = vld [vmem:[#allocation3 + $0xf] sm:$0xff]
        %s663 = scalar_lea.vmem %s5, 80
        %v664 = vld [vmem:[%s663] sm:$0xff]
        %v665 = vld [vmem:[%s663 + $0x8] sm:$0xff]
        %v666 = vld [vmem:[%s663 + $0x10] sm:$0xff]
        %v667 = vld [vmem:[%s663 + $0x18] sm:$0xff]
        %v668 = vld [vmem:[%s663 + $0x20] sm:$0xff]
        %v669 = vld [vmem:[%s663 + $0x28] sm:$0xff]
        %v670 = vld [vmem:[%s663 + $0x30] sm:$0xff]
        %v671 = vld [vmem:[%s663 + $0x38] sm:$0xff]
        %v672 = vld [vmem:[%s663 + $0x40] sm:$0xff]
        %v673 = vld [vmem:[%s663 + $0x48] sm:$0xff]
        %v675 = vsel %vm490, %v661, 0
        %v678 = vsel %vm490, %v662, 0
        %680 = vmatpush.msra.mxu0 0.0
        %681 = vmatpush.msra.mxu0 0.0
        %682 = vmatpush.msra.mxu0 0.0
        %683 = vmatpush.msra.mxu0 0.0
        %684 = vmatpush.msra.mxu0 0.0
        %685 = vmatpush.msra.mxu0 0.0
        %686 = vmatpush.msra.mxu0 %v673
        %687 = vmatpush.msra.mxu0 %v672
        %688 = vmatpush.msra.mxu0 %v671
        %689 = vmatpush.msra.mxu0 %v670
        %690 = vmatpush.msra.mxu0 %v669
        %691 = vmatpush.msra.mxu0 %v668
        %692 = vmatpush.msra.mxu0 %v667
        %693 = vmatpush.msra.mxu0 %v666
        %694 = vmatpush.msra.mxu0 %v665
        %695 = vmatpush.msra.mxu0 %v664
        %696 = vmatmul.f32.gmra.mxu0 %v675
        %v697 = vpop.f32.mrf.mxu0
        %v698 = vadd.f32 0.0, %v697
        %699 = vmatmul.f32.gmra.mxu0 %v678
        %v700 = vpop.f32.mrf.mxu0
        %v701 = vadd.f32 0.0, %v700
        %702 = vdwg.mxu0
        %v704 = vsel %vm490, %v649, 0
        %v707 = vsel %vm490, %v650, 0
        %709 = vmatpush.msra.mxu0 0.0
        %710 = vmatpush.msra.mxu0 0.0
        %711 = vmatpush.msra.mxu0 0.0
        %712 = vmatpush.msra.mxu0 0.0
        %713 = vmatpush.msra.mxu0 0.0
        %714 = vmatpush.msra.mxu0 0.0
        %715 = vmatpush.msra.mxu0 %v660
        %716 = vmatpush.msra.mxu0 %v659
        %717 = vmatpush.msra.mxu0 %v658
        %718 = vmatpush.msra.mxu0 %v657
        %719 = vmatpush.msra.mxu0 %v656
        %720 = vmatpush.msra.mxu0 %v655
        %721 = vmatpush.msra.mxu0 %v654
        %722 = vmatpush.msra.mxu0 %v653
        %723 = vmatpush.msra.mxu0 %v652
        %724 = vmatpush.msra.mxu0 %v651
        %725 = vmatmul.f32.gmra.mxu0 %v704
        %v726 = vpop.f32.mrf.mxu0
        %v727 = vadd.f32 %v698, %v726
        %728 = vmatmul.f32.gmra.mxu0 %v707
        %v729 = vpop.f32.mrf.mxu0
        %v730 = vadd.f32 %v701, %v729
        %731 = vdwg.mxu0
        %v732 = vld [vmem:[#allocation3 + $0x8] sm:$0xff]
        %v733 = vld [vmem:[#allocation3 + $0x10] sm:$0xff]
        %s734 = scalar_lea.vmem %s5, 160
        %v735 = vld [vmem:[%s734] sm:$0xff]
        %v736 = vld [vmem:[%s734 + $0x8] sm:$0xff]
        %v737 = vld [vmem:[%s734 + $0x10] sm:$0xff]
        %v738 = vld [vmem:[%s734 + $0x18] sm:$0xff]
        %v739 = vld [vmem:[%s734 + $0x20] sm:$0xff]
        %v740 = vld [vmem:[%s734 + $0x28] sm:$0xff]
        %v741 = vld [vmem:[%s734 + $0x30] sm:$0xff]
        %v742 = vld [vmem:[%s734 + $0x38] sm:$0xff]
        %v743 = vld [vmem:[%s734 + $0x40] sm:$0xff]
        %v744 = vld [vmem:[%s734 + $0x48] sm:$0xff]
        %v746 = vsel %vm490, %v732, 0
        %v749 = vsel %vm490, %v733, 0
        %751 = vmatpush.msra.mxu0 0.0
        %752 = vmatpush.msra.mxu0 0.0
        %753 = vmatpush.msra.mxu0 0.0
        %754 = vmatpush.msra.mxu0 0.0
        %755 = vmatpush.msra.mxu0 0.0
        %756 = vmatpush.msra.mxu0 0.0
        %757 = vmatpush.msra.mxu0 %v744
        %758 = vmatpush.msra.mxu0 %v743
        %759 = vmatpush.msra.mxu0 %v742
        %760 = vmatpush.msra.mxu0 %v741
        %761 = vmatpush.msra.mxu0 %v740
        %762 = vmatpush.msra.mxu0 %v739
        %763 = vmatpush.msra.mxu0 %v738
        %764 = vmatpush.msra.mxu0 %v737
        %765 = vmatpush.msra.mxu0 %v736
        %766 = vmatpush.msra.mxu0 %v735
        %767 = vmatmul.f32.gmra.mxu0 %v746
        %v768 = vpop.f32.mrf.mxu0
        %v769 = vadd.f32 0.0, %v768
        %770 = vmatmul.f32.gmra.mxu0 %v749
        %v771 = vpop.f32.mrf.mxu0
        %v772 = vadd.f32 0.0, %v771
        %773 = vdwg.mxu0
        %v774 = vadd.f32 %v727, %v769
        %v775 = vadd.f32 %v730, %v772
        %v776 = vld [vmem:[#allocation3 + $0x9] sm:$0xff]
        %v777 = vld [vmem:[#allocation3 + $0x11] sm:$0xff]
        %s778 = scalar_lea.vmem %s5, 240
        %v779 = vld [vmem:[%s778] sm:$0xff]
        %v780 = vld [vmem:[%s778 + $0x8] sm:$0xff]
        %v781 = vld [vmem:[%s778 + $0x10] sm:$0xff]
        %v782 = vld [vmem:[%s778 + $0x18] sm:$0xff]
        %v783 = vld [vmem:[%s778 + $0x20] sm:$0xff]
        %v784 = vld [vmem:[%s778 + $0x28] sm:$0xff]
        %v785 = vld [vmem:[%s778 + $0x30] sm:$0xff]
        %v786 = vld [vmem:[%s778 + $0x38] sm:$0xff]
        %v787 = vld [vmem:[%s778 + $0x40] sm:$0xff]
        %v788 = vld [vmem:[%s778 + $0x48] sm:$0xff]
        %v790 = vsel %vm490, %v776, 0
        %v793 = vsel %vm490, %v777, 0
        %795 = vmatpush.msra.mxu0 0.0
        %796 = vmatpush.msra.mxu0 0.0
        %797 = vmatpush.msra.mxu0 0.0
        %798 = vmatpush.msra.mxu0 0.0
        %799 = vmatpush.msra.mxu0 0.0
        %800 = vmatpush.msra.mxu0 0.0
        %801 = vmatpush.msra.mxu0 %v788
        %802 = vmatpush.msra.mxu0 %v787
        %803 = vmatpush.msra.mxu0 %v786
        %804 = vmatpush.msra.mxu0 %v785
        %805 = vmatpush.msra.mxu0 %v784
        %806 = vmatpush.msra.mxu0 %v783
        %807 = vmatpush.msra.mxu0 %v782
        %808 = vmatpush.msra.mxu0 %v781
        %809 = vmatpush.msra.mxu0 %v780
        %810 = vmatpush.msra.mxu0 %v779
        %811 = vmatmul.f32.gmra.mxu0 %v790
        %v812 = vpop.f32.mrf.mxu0
        %v813 = vadd.f32 0.0, %v812
        %814 = vmatmul.f32.gmra.mxu0 %v793
        %v815 = vpop.f32.mrf.mxu0
        %v816 = vadd.f32 0.0, %v815
        %817 = vdwg.mxu0
        %v818 = vadd.f32 %v774, %v813
        %v819 = vadd.f32 %v775, %v816
        %v820 = vld [vmem:[#allocation3 + $0xa] sm:$0xff]
        %v821 = vld [vmem:[#allocation3 + $0x12] sm:$0xff]
        %s822 = scalar_lea.vmem %s5, 320
        %v823 = vld [vmem:[%s822] sm:$0xff]
        %v824 = vld [vmem:[%s822 + $0x8] sm:$0xff]
        %v825 = vld [vmem:[%s822 + $0x10] sm:$0xff]
        %v826 = vld [vmem:[%s822 + $0x18] sm:$0xff]
        %v827 = vld [vmem:[%s822 + $0x20] sm:$0xff]
        %v828 = vld [vmem:[%s822 + $0x28] sm:$0xff]
        %v829 = vld [vmem:[%s822 + $0x30] sm:$0xff]
        %v830 = vld [vmem:[%s822 + $0x38] sm:$0xff]
        %v831 = vld [vmem:[%s822 + $0x40] sm:$0xff]
        %v832 = vld [vmem:[%s822 + $0x48] sm:$0xff]
        %v834 = vsel %vm490, %v820, 0
        %v837 = vsel %vm490, %v821, 0
        %839 = vmatpush.msra.mxu0 0.0
        %840 = vmatpush.msra.mxu0 0.0
        %841 = vmatpush.msra.mxu0 0.0
        %842 = vmatpush.msra.mxu0 0.0
        %843 = vmatpush.msra.mxu0 0.0
        %844 = vmatpush.msra.mxu0 0.0
        %845 = vmatpush.msra.mxu0 %v832
        %846 = vmatpush.msra.mxu0 %v831
        %847 = vmatpush.msra.mxu0 %v830
        %848 = vmatpush.msra.mxu0 %v829
        %849 = vmatpush.msra.mxu0 %v828
        %850 = vmatpush.msra.mxu0 %v827
        %851 = vmatpush.msra.mxu0 %v826
        %852 = vmatpush.msra.mxu0 %v825
        %853 = vmatpush.msra.mxu0 %v824
        %854 = vmatpush.msra.mxu0 %v823
        %855 = vmatmul.f32.gmra.mxu0 %v834
        %v856 = vpop.f32.mrf.mxu0
        %v857 = vadd.f32 0.0, %v856
        %858 = vmatmul.f32.gmra.mxu0 %v837
        %v859 = vpop.f32.mrf.mxu0
        %v860 = vadd.f32 0.0, %v859
        %861 = vdwg.mxu0
        %v862 = vadd.f32 %v818, %v857
        %v863 = vadd.f32 %v819, %v860
        %v864 = vld [vmem:[%s6] sm:$0x1]
        %v866 = vperm.slane %v864, 0
        %v868 = vadd.f32 %v862, %v866
        %v869 = vadd.f32 %v863, %v866
        %v870 = vmax.f32 %v868, 0.0
        %v871 = vmax.f32 %v869, 0.0
        %874 = vrot.lane.b32.xlu0 %v870, 64
        %v875 = vpop.permute.xlu0 %874
        %876 = vrot.lane.b32.xlu0 %v871, 64
        %v877 = vpop.permute.xlu0 %876
        %880 = vst.msk [vmem:[%s382 + $0x8] sm:$0xff] %vm644, %v875
        %881 = vst.msk [vmem:[%s382 + $0x10] sm:$0xff] %vm407, %v875
        %882 = vst.msk [vmem:[%s382 + $0x20] sm:$0xff] %vm644, %v877
        %883 = vst.msk [vmem:[%s382 + $0x28] sm:$0xff] %vm407, %v877
        %884 = vst.msk [vmem:[#allocation4] sm:$0xff] %vm466, -inf
        %885 = vst.msk [vmem:[#allocation4 + $0x8] sm:$0xff] %vm466, -inf
        %886 = vst.msk [vmem:[#allocation4 + $0x10] sm:$0xff] %vm466, -inf
        %887 = vst.msk [vmem:[#allocation4 + $0x18] sm:$0x1] %vm470, -inf
        %888 = vrot.lane.b32.xlu0 %v383, 4
        %v889 = vpop.permute.xlu0 %888
        %890 = vrot.lane.b32.xlu0 %v384, 4
        %v891 = vpop.permute.xlu0 %890
        %vm894 = vcmask 556064
        %895 = vst.msk [vmem:[#allocation4 + $0x8] sm:$0xff] %vm894, %v889
        %896 = vst.msk [vmem:[#allocation4 + $0x10] sm:$0xff] %vm894, %v891
        %v897 = vld [vmem:[#allocation4 + $0x7] sm:$0xff]
        %v898 = vld [vmem:[#allocation4 + $0xf] sm:$0xff]
        %v899 = vld [vmem:[#allocation4 + $0x8] sm:$0xff]
        %v900 = vld [vmem:[#allocation4 + $0x10] sm:$0xff]
        %v901 = vmax.f32 %v897, %v899
        %v902 = vmax.f32 %v898, %v900
        %v903 = vld [vmem:[#allocation4 + $0x9] sm:$0xff]
        %v904 = vld [vmem:[#allocation4 + $0x11] sm:$0xff]
        %v905 = vmax.f32 %v901, %v903
        %v906 = vmax.f32 %v902, %v904
        %909 = vrot.lane.b32.xlu0 %v905, 124
        %v910 = vpop.permute.xlu0 %909
        %911 = vrot.lane.b32.xlu0 %v906, 124
        %v912 = vpop.permute.xlu0 %911
        %v915 = vmax.f32 %v905, %v910
        %v916 = vmax.f32 %v906, %v912
        %917 = vrot.lane.b32.xlu0 %v905, 120
        %v918 = vpop.permute.xlu0 %917
        %919 = vrot.lane.b32.xlu0 %v906, 120
        %v920 = vpop.permute.xlu0 %919
        %v923 = vmax.f32 %v915, %v918
        %v924 = vmax.f32 %v916, %v920
        %v925 = vld [vmem:[#allocation9] sm:$0xff]
        %v926 = vld [vmem:[#allocation9 + $0x8] sm:$0xff]
        %v927 = vld [vmem:[#allocation9 + $0x10] sm:$0xff]
        %v928 = vld [vmem:[#allocation9 + $0x18] sm:$0xff]
        %v929 = vld [vmem:[#allocation9 + $0x20] sm:$0xff]
        %v930 = vld [vmem:[#allocation9 + $0x28] sm:$0xff]
        %v931 = vld [vmem:[#allocation9 + $0x30] sm:$0xff]
        %v932 = vld [vmem:[#allocation9 + $0x38] sm:$0xff]
        %v933 = vld [vmem:[%s8] sm:$0x1]
        %v935 = vperm.slane %v933, 0
        %v938 = vsel %vm407, %v923, 0
        %v941 = vsel %vm407, %v924, 0
        %943 = vmatpush.msra.mxu0 0.0
        %944 = vmatpush.msra.mxu0 0.0
        %945 = vmatpush.msra.mxu0 0.0
        %946 = vmatpush.msra.mxu0 0.0
        %947 = vmatpush.msra.mxu0 0.0
        %948 = vmatpush.msra.mxu0 0.0
        %949 = vmatpush.msra.mxu0 0.0
        %950 = vmatpush.msra.mxu0 0.0
        %951 = vmatpush.msra.mxu0 %v932
        %952 = vmatpush.msra.mxu0 %v931
        %953 = vmatpush.msra.mxu0 %v930
        %954 = vmatpush.msra.mxu0 %v929
        %955 = vmatpush.msra.mxu0 %v928
        %956 = vmatpush.msra.mxu0 %v927
        %957 = vmatpush.msra.mxu0 %v926
        %958 = vmatpush.msra.mxu0 %v925
        %959 = vmatmul.f32.gmra.mxu0 %v938
        %v960 = vpop.f32.mrf.mxu0
        %v961 = vadd.f32 %v935, %v960
        %962 = vmatmul.f32.gmra.mxu0 %v941
        %v963 = vpop.f32.mrf.mxu0
        %v964 = vadd.f32 %v935, %v963
        %965 = vdwg.mxu0
        %v966 = vmax.f32 %v961, 0.0
        %v967 = vmax.f32 %v964, 0.0
        %970 = vrot.lane.b32.xlu0 %v966, 64
        %v971 = vpop.permute.xlu0 %970
        %972 = vrot.lane.b32.xlu0 %v967, 64
        %v973 = vpop.permute.xlu0 %972
        %976 = vst.msk [vmem:[%s382 + $0x10] sm:$0xff] %vm644, %v971
        %977 = vst.msk [vmem:[%s382 + $0x28] sm:$0xff] %vm644, %v973
        %p978 = scmp.lt.s32.totalorder %s22, 1
        %s979 = scalar_select %p978, %s22, 1
        %s980 = smul.addr %s979, 6
        %s981 = smul.addr %s980, 8
        %s982 = scalar_lea.vmem %s9, %s981
        // Predicated region
        $region69: #{forward.1} parent=55 // pred_check
          %p983 = pneg %p234
        $region70: #{forward.1} parent=55 // pred_check_branch
          %985 = sbr.rel (%p983) target = $region72
        $region71: #{forward.1} parent=55 // pred_region
          _
        $region72: #{forward.1} parent=55 // pred_fallthru
          _
      $region56: #{forward.1} parent=5 // pred_fallthru
        _
      %p986 = scmp.le.s32.totalorder 2, %s17
      // Predicated region
      $region73: #{forward.1} parent=5 // pred_check
        %p987 = pneg %p986
      $region74: #{forward.1} parent=5 // pred_check_branch
        %989 = sbr.rel (%p987) target = $region76
      $region75: #{forward.1} parent=5 // pred_region
        %s990 = ssub.s32 %s17, 2
        // Predicated region
        $region77: #{forward.1} parent=75 // pred_check
          %p991 = pneg %p240
        $region78: #{forward.1} parent=75 // pred_check_branch
          %993 = sbr.rel (%p991) target = $region80
        $region79: #{forward.1} parent=75 // pred_region
          %p994 = scmp.lt.s32.totalorder %s23, 1
          %s995 = scalar_select %p994, %s23, 1
          %s996 = smul.addr %s995, 6
          %s997 = smul.addr %s996, 8
          %s998 = scalar_lea.vmem %s9, %s997
        $region80: #{forward.1} parent=75 // pred_fallthru
          _
      $region76: #{forward.1} parent=5 // pred_fallthru
        _
    $region6: #{forward.1} parent=1 // loop_footer
      %s21 = sadd.s32 1, %s17
    $region7: #{forward.1} parent=1 // loop_footer_branch
      %16 = sbr.rel target = $region3
    $region8: #{forward.1} parent=1 // loop_exit
      _
    %999 = vsyncpa [#allocation6], 1
    %s1000 = scalar_lea.sflag [#allocation6], 1
    %1001 = vsyncpa %s1000, 1
    %1002 = vsyncpa [#allocation8], 1

</llo_original>
